<compile_context>
chip_gen: v7x
topology: tpu7x:2x2x1
jax: 0.10.0
libtpu: 0.0.40
codegen_flags: <defaults>
</compile_context>

<pallas_src>
import math
import functools

import jax
import jax.numpy as jnp
from jax.experimental import pallas as pl
from jax.experimental.pallas import tpu as pltpu


def _layernorm(h, gamma, beta, eps=1e-5):
    mean = jnp.mean(h, axis=-1, keepdims=True)
    var = jnp.mean((h - mean) ** 2, axis=-1, keepdims=True)
    return (h - mean) * jax.lax.rsqrt(var + eps) * gamma + beta


def transformer_block_kernel(
    x_q_ref,      # (1, TQ, D) f32 : query-row tile (also the residual rows)
    x_kv_ref,     # (1, S,  D) f32 : full sequence (for K/V projections)
    wq_ref, bq_ref, wk_ref, bk_ref, wv_ref, bv_ref,
    wo_ref, bo_ref,              # wo_ref: (H, hd, D) bf16
    g1_ref, be1_ref,
    w1_ref, bf1_ref, w2_ref, bf2_ref,
    g2_ref, be2_ref,
    o_ref,                       # (1, TQ, D)
    k_scr, v_scr,                # (H, S, hd) bf16 scratch (persistent per batch)
    *, num_heads, head_dim,
):
    i = pl.program_id(1)

    # --- K/V projections: once per batch element, kept resident in VMEM ----
    @pl.when(i == 0)
    def _():
        xf = x_kv_ref[0].astype(jnp.bfloat16)                         # (S, D)
        k_full = jnp.dot(xf, wk_ref[...],
                         preferred_element_type=jnp.float32) + bk_ref[...]
        v_full = jnp.dot(xf, wv_ref[...],
                         preferred_element_type=jnp.float32) + bv_ref[...]
        for h in range(num_heads):
            lo = h * head_dim
            k_scr[h] = k_full[:, lo:lo + head_dim].astype(jnp.bfloat16)
            v_scr[h] = v_full[:, lo:lo + head_dim].astype(jnp.bfloat16)

    x_q = x_q_ref[0]                                                  # (TQ, D) f32
    xq_bf = x_q.astype(jnp.bfloat16)
    tq = x_q.shape[0]
    d_model = x_q.shape[1]

    # --- Q projection, scale folded in once ---------------------------------
    scale = 1.0 / math.sqrt(head_dim)
    q = (jnp.dot(xq_bf, wq_ref[...], preferred_element_type=jnp.float32)
         + bq_ref[...]) * scale                                       # (TQ, D) f32
    q_heads = jnp.stack(
        [q[:, h * head_dim:(h + 1) * head_dim] for h in range(num_heads)],
        axis=0).astype(jnp.bfloat16)                                  # (H, TQ, hd)

    # --- attention: one batched contraction over all heads ------------------
    s = jnp.einsum("hqd,hkd->hqk", q_heads, k_scr[...],
                   preferred_element_type=jnp.float32)                # (H, TQ, S)
    m = jnp.max(s, axis=-1, keepdims=True)
    e = jnp.exp(s - m)
    denom = jnp.sum(e, axis=-1, keepdims=True)
    p = (e * pl.reciprocal(denom, approx=True)).astype(jnp.bfloat16)  # softmax
    ctx = jnp.einsum("hqk,hkd->hqd", p, v_scr[...],
                     preferred_element_type=jnp.float32)              # (H, TQ, hd)

    # --- output projection: accumulate per head (no concatenate) ------------
    attn_out = jnp.dot(ctx[0].astype(jnp.bfloat16), wo_ref[0],
                       preferred_element_type=jnp.float32)            # (TQ, D)
    for h in range(1, num_heads):
        attn_out = attn_out + jnp.dot(ctx[h].astype(jnp.bfloat16), wo_ref[h],
                                      preferred_element_type=jnp.float32)
    attn_out = attn_out + bo_ref[...]

    # --- residual + LayerNorm 1 (dropout = identity in eval) ----------------
    h1 = _layernorm(x_q + attn_out, g1_ref[...], be1_ref[...])

    # --- FeedForward (bf16 matmuls, f32 accumulation) ------------------------
    ff = jnp.dot(h1.astype(jnp.bfloat16), w1_ref[...],
                 preferred_element_type=jnp.float32) + bf1_ref[...]
    ff = jnp.maximum(ff, 0.0)
    ff = jnp.dot(ff.astype(jnp.bfloat16), w2_ref[...],
                 preferred_element_type=jnp.float32) + bf2_ref[...]

    # --- residual + LayerNorm 2 ----------------------------------------------
    out = _layernorm(h1 + ff, g2_ref[...], be2_ref[...])
    o_ref[0] = out.astype(o_ref.dtype)

    del tq, d_model  # shapes only used implicitly above


def _seq_tile(S):
    if S <= 128:
        return S
    for t in (256, 128):
        if S % t == 0:
            return t
    return S  # fallback: no sequence tiling


def transformer_block(x, params, num_heads):
    B, S, D = x.shape
    assert D % num_heads == 0
    head_dim = D // num_heads
    TQ = _seq_tile(S)
    n_q_tiles = S // TQ

    bf16 = jnp.bfloat16
    # Weights cast to bf16 (half the DMA bytes; MXU-native); biases / LN params
    # stay f32. wo is pre-split per head: (D, D) -> (H, hd, D).
    wo_heads = params["wo"].reshape(num_heads, head_dim, D).astype(bf16)
    param_list = [
        params["wq"].astype(bf16), params["bq"],
        params["wk"].astype(bf16), params["bk"],
        params["wv"].astype(bf16), params["bv"],
        wo_heads, params["bo"],
        params["g1"], params["be1"],
        params["w1"].astype(bf16), params["bf1"],
        params["w2"].astype(bf16), params["bf2"],
        params["g2"], params["be2"],
    ]

    kernel = functools.partial(
        transformer_block_kernel, num_heads=num_heads, head_dim=head_dim)

    in_specs = [
        pl.BlockSpec((1, TQ, D), lambda b, i: (b, i, 0)),  # query-row tile
        pl.BlockSpec((1, S, D), lambda b, i: (b, 0, 0)),   # full seq for K/V
    ]
    for p in param_list:
        in_specs.append(
            pl.BlockSpec(p.shape, lambda b, i, _n=p.ndim: (0,) * _n))

    grid_spec = pltpu.PrefetchScalarGridSpec(
        num_scalar_prefetch=0,
        grid=(B, n_q_tiles),
        in_specs=in_specs,
        out_specs=pl.BlockSpec((1, TQ, D), lambda b, i: (b, i, 0)),
        scratch_shapes=[
            pltpu.VMEM((num_heads, S, head_dim), bf16),   # K heads
            pltpu.VMEM((num_heads, S, head_dim), bf16),   # V heads
        ],
    )

    return pl.pallas_call(
        kernel,
        out_shape=jax.ShapeDtypeStruct((B, S, D), x.dtype),
        grid_spec=grid_spec,
        compiler_params=pltpu.CompilerParams(
            # batch axis megacore-parallel; q-tile axis carries K/V scratch
            # so it must stay sequential.
            dimension_semantics=("parallel", "arbitrary"),
            vmem_limit_bytes=64 * 1024 * 1024,
        ),
    )(x, x, *param_list)


def transformer_block_ref(x, params, num_heads):
    """Pure-JAX f32 reference mirroring the PyTorch forward."""
    B, S, D = x.shape
    hd = D // num_heads
    q = x @ params["wq"] + params["bq"]
    k = x @ params["wk"] + params["bk"]
    v = x @ params["wv"] + params["bv"]
    q = q.reshape(B, S, num_heads, hd).transpose(0, 2, 1, 3)
    k = k.reshape(B, S, num_heads, hd).transpose(0, 2, 1, 3)
    v = v.reshape(B, S, num_heads, hd).transpose(0, 2, 1, 3)
    scores = jnp.einsum("bhqd,bhkd->bhqk", q, k) / math.sqrt(hd)
    attn = jax.nn.softmax(scores, axis=-1)
    out = jnp.einsum("bhqk,bhkd->bhqd", attn, v)
    out = out.transpose(0, 2, 1, 3).reshape(B, S, D)
    attn_out = out @ params["wo"] + params["bo"]

    def ln(h, g, b, eps=1e-5):
        m = jnp.mean(h, axis=-1, keepdims=True)
        var = jnp.mean((h - m) ** 2, axis=-1, keepdims=True)
        return (h - m) / jnp.sqrt(var + eps) * g + b

    h1 = ln(x + attn_out, params["g1"], params["be1"])
    ff = jnp.maximum(h1 @ params["w1"] + params["bf1"], 0.0) @ params["w2"] + params["bf2"]
    return ln(h1 + ff, params["g2"], params["be2"])


def init_params(key, d_model, d_ff):
    ks = jax.random.split(key, 12)
    scale = 0.02

    def w(k, shape):
        return jax.random.normal(k, shape, jnp.float32) * scale

    return {
        "wq": w(ks[0], (d_model, d_model)), "bq": w(ks[1], (1, d_model)),
        "wk": w(ks[2], (d_model, d_model)), "bk": w(ks[3], (1, d_model)),
        "wv": w(ks[4], (d_model, d_model)), "bv": w(ks[5], (1, d_model)),
        "wo": w(ks[6], (d_model, d_model)), "bo": w(ks[7], (1, d_model)),
        "g1": jnp.ones((1, d_model), jnp.float32),
        "be1": jnp.zeros((1, d_model), jnp.float32),
        "w1": w(ks[8], (d_model, d_ff)), "bf1": w(ks[9], (1, d_ff)),
        "w2": w(ks[10], (d_ff, d_model)), "bf2": w(ks[11], (1, d_model)),
        "g2": jnp.ones((1, d_model), jnp.float32),
        "be2": jnp.zeros((1, d_model), jnp.float32),
    }


if __name__ == "__main__":
    # Small deterministic setup: batch=2, seq=8, d_model=32, heads=4, d_ff=64
    B, S, D, H, D_FF = 2, 8, 32, 4, 64
    key = jax.random.PRNGKey(0)
    k_x, k_p = jax.random.split(key)
    x = jax.random.normal(k_x, (B, S, D), jnp.float32)
    params = init_params(k_p, D, D_FF)

    out = transformer_block(x, params, num_heads=H)
    out = jax.block_until_ready(out)

    ref = transformer_block_ref(x, params, num_heads=H)
    assert out.shape == (B, S, D)
    # bf16 MXU inputs + approx reciprocal => compare with bf16-level tolerance.
    assert jnp.allclose(out, ref, atol=2e-2, rtol=2e-2), "mismatch vs reference"

    print("KERNEL_OK")
</pallas_src>

<mosaic_0001>
module attributes {stable_mosaic.version = 11 : i64} {
  func.func @transformer_block_kernel(%arg0: i32, %arg1: i32, %arg2: memref<1x8x32xf32, #tpu.memory_space<vmem>>, %arg3: memref<1x8x32xf32, #tpu.memory_space<vmem>>, %arg4: memref<32x32xbf16, #tpu.memory_space<vmem>>, %arg5: memref<1x32xf32, #tpu.memory_space<vmem>>, %arg6: memref<32x32xbf16, #tpu.memory_space<vmem>>, %arg7: memref<1x32xf32, #tpu.memory_space<vmem>>, %arg8: memref<32x32xbf16, #tpu.memory_space<vmem>>, %arg9: memref<1x32xf32, #tpu.memory_space<vmem>>, %arg10: memref<4x8x32xbf16, #tpu.memory_space<vmem>>, %arg11: memref<1x32xf32, #tpu.memory_space<vmem>>, %arg12: memref<1x32xf32, #tpu.memory_space<vmem>>, %arg13: memref<1x32xf32, #tpu.memory_space<vmem>>, %arg14: memref<32x64xbf16, #tpu.memory_space<vmem>>, %arg15: memref<1x64xf32, #tpu.memory_space<vmem>>, %arg16: memref<64x32xbf16, #tpu.memory_space<vmem>>, %arg17: memref<1x32xf32, #tpu.memory_space<vmem>>, %arg18: memref<1x32xf32, #tpu.memory_space<vmem>>, %arg19: memref<1x32xf32, #tpu.memory_space<vmem>>, %arg20: memref<1x8x32xf32, #tpu.memory_space<vmem>>, %arg21: memref<4x8x8xbf16, #tpu.memory_space<vmem>>, %arg22: memref<4x8x8xbf16, #tpu.memory_space<vmem>>) attributes {dimension_semantics = [#tpu.dimension_semantics<parallel>, #tpu.dimension_semantics<arbitrary>], iteration_bounds = array<i64: 2, 1>, scalar_prefetch = 0 : i64, scratch_operands = 2 : i64, tpu.core_type = #tpu.core_type<tc>, window_params = [{transform_indices = @transform_0, window_bounds = array<i64: 1, 8, 32>}, {transform_indices = @transform_1, window_bounds = array<i64: 1, 8, 32>}, {pipeline_mode = #tpu.pipeline_mode<synchronous>, transform_indices = @transform_2, window_bounds = array<i64: 32, 32>}, {pipeline_mode = #tpu.pipeline_mode<synchronous>, transform_indices = @transform_3, window_bounds = array<i64: 1, 32>}, {pipeline_mode = #tpu.pipeline_mode<synchronous>, transform_indices = @transform_4, window_bounds = array<i64: 32, 32>}, {pipeline_mode = #tpu.pipeline_mode<synchronous>, transform_indices = @transform_5, window_bounds = array<i64: 1, 32>}, {pipeline_mode = #tpu.pipeline_mode<synchronous>, transform_indices = @transform_6, window_bounds = array<i64: 32, 32>}, {pipeline_mode = #tpu.pipeline_mode<synchronous>, transform_indices = @transform_7, window_bounds = array<i64: 1, 32>}, {pipeline_mode = #tpu.pipeline_mode<synchronous>, transform_indices = @transform_8, window_bounds = array<i64: 4, 8, 32>}, {pipeline_mode = #tpu.pipeline_mode<synchronous>, transform_indices = @transform_9, window_bounds = array<i64: 1, 32>}, {pipeline_mode = #tpu.pipeline_mode<synchronous>, transform_indices = @transform_10, window_bounds = array<i64: 1, 32>}, {pipeline_mode = #tpu.pipeline_mode<synchronous>, transform_indices = @transform_11, window_bounds = array<i64: 1, 32>}, {pipeline_mode = #tpu.pipeline_mode<synchronous>, transform_indices = @transform_12, window_bounds = array<i64: 32, 64>}, {pipeline_mode = #tpu.pipeline_mode<synchronous>, transform_indices = @transform_13, window_bounds = array<i64: 1, 64>}, {pipeline_mode = #tpu.pipeline_mode<synchronous>, transform_indices = @transform_14, window_bounds = array<i64: 64, 32>}, {pipeline_mode = #tpu.pipeline_mode<synchronous>, transform_indices = @transform_15, window_bounds = array<i64: 1, 32>}, {pipeline_mode = #tpu.pipeline_mode<synchronous>, transform_indices = @transform_16, window_bounds = array<i64: 1, 32>}, {pipeline_mode = #tpu.pipeline_mode<synchronous>, transform_indices = @transform_17, window_bounds = array<i64: 1, 32>}, {transform_indices = @transform_18, window_bounds = array<i64: 1, 8, 32>}]} {
    %c0_i32 = arith.constant 0 : i32
    %0 = arith.cmpi eq, %arg1, %c0_i32 : i32
    %1 = arith.extui %0 : i1 to i32
    %c0_i32_0 = arith.constant 0 : i32
    %2 = arith.cmpi ne, %1, %c0_i32_0 : i32
    scf.if %2 {
      %c0_65 = arith.constant 0 : index
      %c0_66 = arith.constant 0 : index
      %c0_67 = arith.constant 0 : index
      %135 = vector.load %arg3[%c0_65, %c0_66, %c0_67] : memref<1x8x32xf32, #tpu.memory_space<vmem>>, vector<1x8x32xf32>
      %136 = vector.shape_cast %135 : vector<1x8x32xf32> to vector<8x32xf32>
      %137 = arith.truncf %136 : vector<8x32xf32> to vector<8x32xbf16>
      %c0_68 = arith.constant 0 : index
      %c0_69 = arith.constant 0 : index
      %138 = vector.load %arg6[%c0_68, %c0_69] : memref<32x32xbf16, #tpu.memory_space<vmem>>, vector<32x32xbf16>
      %cst_70 = arith.constant dense<0.000000e+00> : vector<8x32xf32>
      %139 = tpu.matmul %137, %138, %cst_70 {dimension_numbers = #tpu.dot_dimension_numbers<[1], [0], [0], [1], [0, 0, 1, 1], [], []>} : vector<8x32xbf16>, vector<32x32xbf16>, vector<8x32xf32> -> vector<8x32xf32>
      %c0_71 = arith.constant 0 : index
      %c0_72 = arith.constant 0 : index
      %140 = vector.load %arg7[%c0_71, %c0_72] : memref<1x32xf32, #tpu.memory_space<vmem>>, vector<1x32xf32>
      %141 = vector.broadcast %140 : vector<1x32xf32> to vector<8x32xf32>
      %142 = arith.addf %139, %141 : vector<8x32xf32>
      %c0_73 = arith.constant 0 : index
      %c0_74 = arith.constant 0 : index
      %143 = vector.load %arg8[%c0_73, %c0_74] : memref<32x32xbf16, #tpu.memory_space<vmem>>, vector<32x32xbf16>
      %cst_75 = arith.constant dense<0.000000e+00> : vector<8x32xf32>
      %144 = tpu.matmul %137, %143, %cst_75 {dimension_numbers = #tpu.dot_dimension_numbers<[1], [0], [0], [1], [0, 0, 1, 1], [], []>} : vector<8x32xbf16>, vector<32x32xbf16>, vector<8x32xf32> -> vector<8x32xf32>
      %c0_76 = arith.constant 0 : index
      %c0_77 = arith.constant 0 : index
      %145 = vector.load %arg9[%c0_76, %c0_77] : memref<1x32xf32, #tpu.memory_space<vmem>>, vector<1x32xf32>
      %146 = vector.broadcast %145 : vector<1x32xf32> to vector<8x32xf32>
      %147 = arith.addf %144, %146 : vector<8x32xf32>
      %148 = vector.extract_strided_slice %142 {offsets = [0, 0], sizes = [8, 8], strides = [1, 1]} : vector<8x32xf32> to vector<8x8xf32>
      %149 = arith.truncf %148 : vector<8x8xf32> to vector<8x8xbf16>
      %c0_78 = arith.constant 0 : index
      %c0_79 = arith.constant 0 : index
      %c0_80 = arith.constant 0 : index
      %150 = vector.load %arg21[%c0_78, %c0_79, %c0_80] : memref<4x8x8xbf16, #tpu.memory_space<vmem>>, vector<1x8x8xbf16>
      %151 = vector.shape_cast %150 : vector<1x8x8xbf16> to vector<8x8xbf16>
      %152 = vector.shape_cast %149 : vector<8x8xbf16> to vector<1x8x8xbf16>
      tpu.vector_store %arg21[%c0_78, %c0_79, %c0_80], %152 {strides = array<i32>} : memref<4x8x8xbf16, #tpu.memory_space<vmem>>, vector<1x8x8xbf16>,
      %153 = vector.extract_strided_slice %147 {offsets = [0, 0], sizes = [8, 8], strides = [1, 1]} : vector<8x32xf32> to vector<8x8xf32>
      %154 = arith.truncf %153 : vector<8x8xf32> to vector<8x8xbf16>
      %c0_81 = arith.constant 0 : index
      %c0_82 = arith.constant 0 : index
      %c0_83 = arith.constant 0 : index
      %155 = vector.load %arg22[%c0_81, %c0_82, %c0_83] : memref<4x8x8xbf16, #tpu.memory_space<vmem>>, vector<1x8x8xbf16>
      %156 = vector.shape_cast %155 : vector<1x8x8xbf16> to vector<8x8xbf16>
      %157 = vector.shape_cast %154 : vector<8x8xbf16> to vector<1x8x8xbf16>
      tpu.vector_store %arg22[%c0_81, %c0_82, %c0_83], %157 {strides = array<i32>} : memref<4x8x8xbf16, #tpu.memory_space<vmem>>, vector<1x8x8xbf16>,
      %158 = vector.extract_strided_slice %142 {offsets = [0, 8], sizes = [8, 8], strides = [1, 1]} : vector<8x32xf32> to vector<8x8xf32>
      %159 = arith.truncf %158 : vector<8x8xf32> to vector<8x8xbf16>
      %c1_84 = arith.constant 1 : index
      %c0_85 = arith.constant 0 : index
      %c0_86 = arith.constant 0 : index
      %160 = vector.load %arg21[%c1_84, %c0_85, %c0_86] : memref<4x8x8xbf16, #tpu.memory_space<vmem>>, vector<1x8x8xbf16>
      %161 = vector.shape_cast %160 : vector<1x8x8xbf16> to vector<8x8xbf16>
      %162 = vector.shape_cast %159 : vector<8x8xbf16> to vector<1x8x8xbf16>
      tpu.vector_store %arg21[%c1_84, %c0_85, %c0_86], %162 {strides = array<i32>} : memref<4x8x8xbf16, #tpu.memory_space<vmem>>, vector<1x8x8xbf16>,
      %163 = vector.extract_strided_slice %147 {offsets = [0, 8], sizes = [8, 8], strides = [1, 1]} : vector<8x32xf32> to vector<8x8xf32>
      %164 = arith.truncf %163 : vector<8x8xf32> to vector<8x8xbf16>
      %c1_87 = arith.constant 1 : index
      %c0_88 = arith.constant 0 : index
      %c0_89 = arith.constant 0 : index
      %165 = vector.load %arg22[%c1_87, %c0_88, %c0_89] : memref<4x8x8xbf16, #tpu.memory_space<vmem>>, vector<1x8x8xbf16>
      %166 = vector.shape_cast %165 : vector<1x8x8xbf16> to vector<8x8xbf16>
      %167 = vector.shape_cast %164 : vector<8x8xbf16> to vector<1x8x8xbf16>
      tpu.vector_store %arg22[%c1_87, %c0_88, %c0_89], %167 {strides = array<i32>} : memref<4x8x8xbf16, #tpu.memory_space<vmem>>, vector<1x8x8xbf16>,
      %168 = vector.extract_strided_slice %142 {offsets = [0, 16], sizes = [8, 8], strides = [1, 1]} : vector<8x32xf32> to vector<8x8xf32>
      %169 = arith.truncf %168 : vector<8x8xf32> to vector<8x8xbf16>
      %c2_90 = arith.constant 2 : index
      %c0_91 = arith.constant 0 : index
      %c0_92 = arith.constant 0 : index
      %170 = vector.load %arg21[%c2_90, %c0_91, %c0_92] : memref<4x8x8xbf16, #tpu.memory_space<vmem>>, vector<1x8x8xbf16>
      %171 = vector.shape_cast %170 : vector<1x8x8xbf16> to vector<8x8xbf16>
      %172 = vector.shape_cast %169 : vector<8x8xbf16> to vector<1x8x8xbf16>
      tpu.vector_store %arg21[%c2_90, %c0_91, %c0_92], %172 {strides = array<i32>} : memref<4x8x8xbf16, #tpu.memory_space<vmem>>, vector<1x8x8xbf16>,
      %173 = vector.extract_strided_slice %147 {offsets = [0, 16], sizes = [8, 8], strides = [1, 1]} : vector<8x32xf32> to vector<8x8xf32>
      %174 = arith.truncf %173 : vector<8x8xf32> to vector<8x8xbf16>
      %c2_93 = arith.constant 2 : index
      %c0_94 = arith.constant 0 : index
      %c0_95 = arith.constant 0 : index
      %175 = vector.load %arg22[%c2_93, %c0_94, %c0_95] : memref<4x8x8xbf16, #tpu.memory_space<vmem>>, vector<1x8x8xbf16>
      %176 = vector.shape_cast %175 : vector<1x8x8xbf16> to vector<8x8xbf16>
      %177 = vector.shape_cast %174 : vector<8x8xbf16> to vector<1x8x8xbf16>
      tpu.vector_store %arg22[%c2_93, %c0_94, %c0_95], %177 {strides = array<i32>} : memref<4x8x8xbf16, #tpu.memory_space<vmem>>, vector<1x8x8xbf16>,
      %178 = vector.extract_strided_slice %142 {offsets = [0, 24], sizes = [8, 8], strides = [1, 1]} : vector<8x32xf32> to vector<8x8xf32>
      %179 = arith.truncf %178 : vector<8x8xf32> to vector<8x8xbf16>
      %c3_96 = arith.constant 3 : index
      %c0_97 = arith.constant 0 : index
      %c0_98 = arith.constant 0 : index
      %180 = vector.load %arg21[%c3_96, %c0_97, %c0_98] : memref<4x8x8xbf16, #tpu.memory_space<vmem>>, vector<1x8x8xbf16>
      %181 = vector.shape_cast %180 : vector<1x8x8xbf16> to vector<8x8xbf16>
      %182 = vector.shape_cast %179 : vector<8x8xbf16> to vector<1x8x8xbf16>
      tpu.vector_store %arg21[%c3_96, %c0_97, %c0_98], %182 {strides = array<i32>} : memref<4x8x8xbf16, #tpu.memory_space<vmem>>, vector<1x8x8xbf16>,
      %183 = vector.extract_strided_slice %147 {offsets = [0, 24], sizes = [8, 8], strides = [1, 1]} : vector<8x32xf32> to vector<8x8xf32>
      %184 = arith.truncf %183 : vector<8x8xf32> to vector<8x8xbf16>
      %c3_99 = arith.constant 3 : index
      %c0_100 = arith.constant 0 : index
      %c0_101 = arith.constant 0 : index
      %185 = vector.load %arg22[%c3_99, %c0_100, %c0_101] : memref<4x8x8xbf16, #tpu.memory_space<vmem>>, vector<1x8x8xbf16>
      %186 = vector.shape_cast %185 : vector<1x8x8xbf16> to vector<8x8xbf16>
      %187 = vector.shape_cast %184 : vector<8x8xbf16> to vector<1x8x8xbf16>
      tpu.vector_store %arg22[%c3_99, %c0_100, %c0_101], %187 {strides = array<i32>} : memref<4x8x8xbf16, #tpu.memory_space<vmem>>, vector<1x8x8xbf16>,
    } else {
    }
    %c0 = arith.constant 0 : index
    %c0_1 = arith.constant 0 : index
    %c0_2 = arith.constant 0 : index
    %3 = vector.load %arg2[%c0, %c0_1, %c0_2] : memref<1x8x32xf32, #tpu.memory_space<vmem>>, vector<1x8x32xf32>
    %4 = vector.shape_cast %3 : vector<1x8x32xf32> to vector<8x32xf32>
    %5 = arith.truncf %4 : vector<8x32xf32> to vector<8x32xbf16>
    %c0_3 = arith.constant 0 : index
    %c0_4 = arith.constant 0 : index
    %6 = vector.load %arg4[%c0_3, %c0_4] : memref<32x32xbf16, #tpu.memory_space<vmem>>, vector<32x32xbf16>
    %cst = arith.constant dense<0.000000e+00> : vector<8x32xf32>
    %7 = tpu.matmul %5, %6, %cst {dimension_numbers = #tpu.dot_dimension_numbers<[1], [0], [0], [1], [0, 0, 1, 1], [], []>} : vector<8x32xbf16>, vector<32x32xbf16>, vector<8x32xf32> -> vector<8x32xf32>
    %c0_5 = arith.constant 0 : index
    %c0_6 = arith.constant 0 : index
    %8 = vector.load %arg5[%c0_5, %c0_6] : memref<1x32xf32, #tpu.memory_space<vmem>>, vector<1x32xf32>
    %9 = vector.broadcast %8 : vector<1x32xf32> to vector<8x32xf32>
    %10 = arith.addf %7, %9 : vector<8x32xf32>
    %cst_7 = arith.constant 0.353553385 : f32
    %11 = vector.broadcast %cst_7 : f32 to vector<8x32xf32>
    %12 = arith.mulf %10, %11 : vector<8x32xf32>
    %13 = vector.extract_strided_slice %12 {offsets = [0, 0], sizes = [8, 8], strides = [1, 1]} : vector<8x32xf32> to vector<8x8xf32>
    %14 = vector.extract_strided_slice %12 {offsets = [0, 8], sizes = [8, 8], strides = [1, 1]} : vector<8x32xf32> to vector<8x8xf32>
    %15 = vector.extract_strided_slice %12 {offsets = [0, 16], sizes = [8, 8], strides = [1, 1]} : vector<8x32xf32> to vector<8x8xf32>
    %16 = vector.extract_strided_slice %12 {offsets = [0, 24], sizes = [8, 8], strides = [1, 1]} : vector<8x32xf32> to vector<8x8xf32>
    %17 = vector.shape_cast %13 : vector<8x8xf32> to vector<1x8x8xf32>
    %18 = vector.shape_cast %14 : vector<8x8xf32> to vector<1x8x8xf32>
    %19 = vector.shape_cast %15 : vector<8x8xf32> to vector<1x8x8xf32>
    %20 = vector.shape_cast %16 : vector<8x8xf32> to vector<1x8x8xf32>
    %21 = tpu.concatenate %17, %18, %19, %20 in 0 : vector<1x8x8xf32>, vector<1x8x8xf32>, vector<1x8x8xf32>, vector<1x8x8xf32> -> vector<4x8x8xf32>
    %22 = arith.truncf %21 : vector<4x8x8xf32> to vector<4x8x8xbf16>
    %c0_8 = arith.constant 0 : index
    %c0_9 = arith.constant 0 : index
    %c0_10 = arith.constant 0 : index
    %23 = vector.load %arg21[%c0_8, %c0_9, %c0_10] : memref<4x8x8xbf16, #tpu.memory_space<vmem>>, vector<4x8x8xbf16>
    "tpu.trace_start"() <{level = 10 : i32, message = "hqd,hkd->hqk"}> : () -> ()
    %cst_11 = arith.constant dense<0.000000e+00> : vector<4x8x8xf32>
    %24 = tpu.matmul %22, %23, %cst_11 {dimension_numbers = #tpu.dot_dimension_numbers<[2], [2], [1], [1], [0, 0, 0, 1, 1, 1], [0], [0]>} : vector<4x8x8xbf16>, vector<4x8x8xbf16>, vector<4x8x8xf32> -> vector<4x8x8xf32>
    "tpu.trace_stop"() : () -> ()
    %cst_12 = arith.constant dense<0xFF800000> : vector<4x8xf32>
    %25 = vector.multi_reduction <maximumf>, %24, %cst_12 [2] : vector<4x8x8xf32> to vector<4x8xf32>
    %26 = vector.shape_cast %25 : vector<4x8xf32> to vector<4x8x1xf32>
    %27 = vector.broadcast %26 : vector<4x8x1xf32> to vector<4x8x8xf32>
    %28 = arith.subf %24, %27 : vector<4x8x8xf32>
    %29 = math.exp %28 : vector<4x8x8xf32>
    %cst_13 = arith.constant dense<0.000000e+00> : vector<4x8xf32>
    %30 = vector.multi_reduction <add>, %29, %cst_13 [2] : vector<4x8x8xf32> to vector<4x8xf32>
    %31 = vector.shape_cast %30 : vector<4x8xf32> to vector<4x8x1xf32>
    %32 = tpu.reciprocal %31 {approx = true} : vector<4x8x1xf32> -> vector<4x8x1xf32>
    %33 = vector.broadcast %32 : vector<4x8x1xf32> to vector<4x8x8xf32>
    %34 = arith.mulf %29, %33 : vector<4x8x8xf32>
    %35 = arith.truncf %34 : vector<4x8x8xf32> to vector<4x8x8xbf16>
    %c0_14 = arith.constant 0 : index
    %c0_15 = arith.constant 0 : index
    %c0_16 = arith.constant 0 : index
    %36 = vector.load %arg22[%c0_14, %c0_15, %c0_16] : memref<4x8x8xbf16, #tpu.memory_space<vmem>>, vector<4x8x8xbf16>
    "tpu.trace_start"() <{level = 10 : i32, message = "hqk,hkd->hqd"}> : () -> ()
    %cst_17 = arith.constant dense<0.000000e+00> : vector<4x8x8xf32>
    %37 = tpu.matmul %35, %36, %cst_17 {dimension_numbers = #tpu.dot_dimension_numbers<[2], [1], [1], [2], [0, 0, 0, 1, 1, 2], [0], [0]>} : vector<4x8x8xbf16>, vector<4x8x8xbf16>, vector<4x8x8xf32> -> vector<4x8x8xf32>
    "tpu.trace_stop"() : () -> ()
    %38 = vector.extract_strided_slice %37 {offsets = [0, 0, 0], sizes = [1, 8, 8], strides = [1, 1, 1]} : vector<4x8x8xf32> to vector<1x8x8xf32>
    %39 = vector.shape_cast %38 : vector<1x8x8xf32> to vector<8x8xf32>
    %40 = arith.truncf %39 : vector<8x8xf32> to vector<8x8xbf16>
    %c0_18 = arith.constant 0 : index
    %c0_19 = arith.constant 0 : index
    %c0_20 = arith.constant 0 : index
    %41 = vector.load %arg10[%c0_18, %c0_19, %c0_20] : memref<4x8x32xbf16, #tpu.memory_space<vmem>>, vector<1x8x32xbf16>
    %42 = vector.shape_cast %41 : vector<1x8x32xbf16> to vector<8x32xbf16>
    %cst_21 = arith.constant dense<0.000000e+00> : vector<8x32xf32>
    %43 = tpu.matmul %40, %42, %cst_21 {dimension_numbers = #tpu.dot_dimension_numbers<[1], [0], [0], [1], [0, 0, 1, 1], [], []>} : vector<8x8xbf16>, vector<8x32xbf16>, vector<8x32xf32> -> vector<8x32xf32>
    %44 = vector.extract_strided_slice %37 {offsets = [1, 0, 0], sizes = [1, 8, 8], strides = [1, 1, 1]} : vector<4x8x8xf32> to vector<1x8x8xf32>
    %45 = vector.shape_cast %44 : vector<1x8x8xf32> to vector<8x8xf32>
    %46 = arith.truncf %45 : vector<8x8xf32> to vector<8x8xbf16>
    %c1 = arith.constant 1 : index
    %c0_22 = arith.constant 0 : index
    %c0_23 = arith.constant 0 : index
    %47 = vector.load %arg10[%c1, %c0_22, %c0_23] : memref<4x8x32xbf16, #tpu.memory_space<vmem>>, vector<1x8x32xbf16>
    %48 = vector.shape_cast %47 : vector<1x8x32xbf16> to vector<8x32xbf16>
    %cst_24 = arith.constant dense<0.000000e+00> : vector<8x32xf32>
    %49 = tpu.matmul %46, %48, %cst_24 {dimension_numbers = #tpu.dot_dimension_numbers<[1], [0], [0], [1], [0, 0, 1, 1], [], []>} : vector<8x8xbf16>, vector<8x32xbf16>, vector<8x32xf32> -> vector<8x32xf32>
    %50 = arith.addf %43, %49 : vector<8x32xf32>
    %51 = vector.extract_strided_slice %37 {offsets = [2, 0, 0], sizes = [1, 8, 8], strides = [1, 1, 1]} : vector<4x8x8xf32> to vector<1x8x8xf32>
    %52 = vector.shape_cast %51 : vector<1x8x8xf32> to vector<8x8xf32>
    %53 = arith.truncf %52 : vector<8x8xf32> to vector<8x8xbf16>
    %c2 = arith.constant 2 : index
    %c0_25 = arith.constant 0 : index
    %c0_26 = arith.constant 0 : index
    %54 = vector.load %arg10[%c2, %c0_25, %c0_26] : memref<4x8x32xbf16, #tpu.memory_space<vmem>>, vector<1x8x32xbf16>
    %55 = vector.shape_cast %54 : vector<1x8x32xbf16> to vector<8x32xbf16>
    %cst_27 = arith.constant dense<0.000000e+00> : vector<8x32xf32>
    %56 = tpu.matmul %53, %55, %cst_27 {dimension_numbers = #tpu.dot_dimension_numbers<[1], [0], [0], [1], [0, 0, 1, 1], [], []>} : vector<8x8xbf16>, vector<8x32xbf16>, vector<8x32xf32> -> vector<8x32xf32>
    %57 = arith.addf %50, %56 : vector<8x32xf32>
    %58 = vector.extract_strided_slice %37 {offsets = [3, 0, 0], sizes = [1, 8, 8], strides = [1, 1, 1]} : vector<4x8x8xf32> to vector<1x8x8xf32>
    %59 = vector.shape_cast %58 : vector<1x8x8xf32> to vector<8x8xf32>
    %60 = arith.truncf %59 : vector<8x8xf32> to vector<8x8xbf16>
    %c3 = arith.constant 3 : index
    %c0_28 = arith.constant 0 : index
    %c0_29 = arith.constant 0 : index
    %61 = vector.load %arg10[%c3, %c0_28, %c0_29] : memref<4x8x32xbf16, #tpu.memory_space<vmem>>, vector<1x8x32xbf16>
    %62 = vector.shape_cast %61 : vector<1x8x32xbf16> to vector<8x32xbf16>
    %cst_30 = arith.constant dense<0.000000e+00> : vector<8x32xf32>
    %63 = tpu.matmul %60, %62, %cst_30 {dimension_numbers = #tpu.dot_dimension_numbers<[1], [0], [0], [1], [0, 0, 1, 1], [], []>} : vector<8x8xbf16>, vector<8x32xbf16>, vector<8x32xf32> -> vector<8x32xf32>
    %64 = arith.addf %57, %63 : vector<8x32xf32>
    %c0_31 = arith.constant 0 : index
    %c0_32 = arith.constant 0 : index
    %65 = vector.load %arg11[%c0_31, %c0_32] : memref<1x32xf32, #tpu.memory_space<vmem>>, vector<1x32xf32>
    %66 = vector.broadcast %65 : vector<1x32xf32> to vector<8x32xf32>
    %67 = arith.addf %64, %66 : vector<8x32xf32>
    %68 = arith.addf %4, %67 : vector<8x32xf32>
    %c0_33 = arith.constant 0 : index
    %c0_34 = arith.constant 0 : index
    %69 = vector.load %arg12[%c0_33, %c0_34] : memref<1x32xf32, #tpu.memory_space<vmem>>, vector<1x32xf32>
    %c0_35 = arith.constant 0 : index
    %c0_36 = arith.constant 0 : index
    %70 = vector.load %arg13[%c0_35, %c0_36] : memref<1x32xf32, #tpu.memory_space<vmem>>, vector<1x32xf32>
    %cst_37 = arith.constant dense<0.000000e+00> : vector<8xf32>
    %71 = vector.multi_reduction <add>, %68, %cst_37 [1] : vector<8x32xf32> to vector<8xf32>
    %72 = vector.shape_cast %71 : vector<8xf32> to vector<8x1xf32>
    %cst_38 = arith.constant 3.200000e+01 : f32
    %73 = vector.broadcast %cst_38 : f32 to vector<8x1xf32>
    %74 = arith.divf %72, %73 : vector<8x1xf32>
    %75 = vector.broadcast %74 : vector<8x1xf32> to vector<8x32xf32>
    %76 = arith.subf %68, %75 : vector<8x32xf32>
    %77 = arith.mulf %76, %76 : vector<8x32xf32>
    %cst_39 = arith.constant dense<0.000000e+00> : vector<8xf32>
    %78 = vector.multi_reduction <add>, %77, %cst_39 [1] : vector<8x32xf32> to vector<8xf32>
    %79 = vector.shape_cast %78 : vector<8xf32> to vector<8x1xf32>
    %cst_40 = arith.constant 3.200000e+01 : f32
    %80 = vector.broadcast %cst_40 : f32 to vector<8x1xf32>
    %81 = arith.divf %79, %80 : vector<8x1xf32>
    %82 = vector.broadcast %74 : vector<8x1xf32> to vector<8x32xf32>
    %83 = arith.subf %68, %82 : vector<8x32xf32>
    %cst_41 = arith.constant 9.99999974E-6 : f32
    %84 = vector.broadcast %cst_41 : f32 to vector<8x1xf32>
    %85 = arith.addf %81, %84 : vector<8x1xf32>
    %86 = math.rsqrt %85 : vector<8x1xf32>
    %87 = vector.broadcast %86 : vector<8x1xf32> to vector<8x32xf32>
    %88 = arith.mulf %83, %87 : vector<8x32xf32>
    %89 = vector.broadcast %69 : vector<1x32xf32> to vector<8x32xf32>
    %90 = arith.mulf %88, %89 : vector<8x32xf32>
    %91 = vector.broadcast %70 : vector<1x32xf32> to vector<8x32xf32>
    %92 = arith.addf %90, %91 : vector<8x32xf32>
    %93 = arith.truncf %92 : vector<8x32xf32> to vector<8x32xbf16>
    %c0_42 = arith.constant 0 : index
    %c0_43 = arith.constant 0 : index
    %94 = vector.load %arg14[%c0_42, %c0_43] : memref<32x64xbf16, #tpu.memory_space<vmem>>, vector<32x64xbf16>
    %cst_44 = arith.constant dense<0.000000e+00> : vector<8x64xf32>
    %95 = tpu.matmul %93, %94, %cst_44 {dimension_numbers = #tpu.dot_dimension_numbers<[1], [0], [0], [1], [0, 0, 1, 1], [], []>} : vector<8x32xbf16>, vector<32x64xbf16>, vector<8x64xf32> -> vector<8x64xf32>
    %c0_45 = arith.constant 0 : index
    %c0_46 = arith.constant 0 : index
    %96 = vector.load %arg15[%c0_45, %c0_46] : memref<1x64xf32, #tpu.memory_space<vmem>>, vector<1x64xf32>
    %97 = vector.broadcast %96 : vector<1x64xf32> to vector<8x64xf32>
    %98 = arith.addf %95, %97 : vector<8x64xf32>
    %cst_47 = arith.constant 0.000000e+00 : f32
    %99 = vector.broadcast %cst_47 : f32 to vector<8x64xf32>
    %100 = arith.maximumf %98, %99 : vector<8x64xf32>
    %101 = arith.truncf %100 : vector<8x64xf32> to vector<8x64xbf16>
    %c0_48 = arith.constant 0 : index
    %c0_49 = arith.constant 0 : index
    %102 = vector.load %arg16[%c0_48, %c0_49] : memref<64x32xbf16, #tpu.memory_space<vmem>>, vector<64x32xbf16>
    %cst_50 = arith.constant dense<0.000000e+00> : vector<8x32xf32>
    %103 = tpu.matmul %101, %102, %cst_50 {dimension_numbers = #tpu.dot_dimension_numbers<[1], [0], [0], [1], [0, 0, 1, 1], [], []>} : vector<8x64xbf16>, vector<64x32xbf16>, vector<8x32xf32> -> vector<8x32xf32>
    %c0_51 = arith.constant 0 : index
    %c0_52 = arith.constant 0 : index
    %104 = vector.load %arg17[%c0_51, %c0_52] : memref<1x32xf32, #tpu.memory_space<vmem>>, vector<1x32xf32>
    %105 = vector.broadcast %104 : vector<1x32xf32> to vector<8x32xf32>
    %106 = arith.addf %103, %105 : vector<8x32xf32>
    %107 = arith.addf %92, %106 : vector<8x32xf32>
    %c0_53 = arith.constant 0 : index
    %c0_54 = arith.constant 0 : index
    %108 = vector.load %arg18[%c0_53, %c0_54] : memref<1x32xf32, #tpu.memory_space<vmem>>, vector<1x32xf32>
    %c0_55 = arith.constant 0 : index
    %c0_56 = arith.constant 0 : index
    %109 = vector.load %arg19[%c0_55, %c0_56] : memref<1x32xf32, #tpu.memory_space<vmem>>, vector<1x32xf32>
    %cst_57 = arith.constant dense<0.000000e+00> : vector<8xf32>
    %110 = vector.multi_reduction <add>, %107, %cst_57 [1] : vector<8x32xf32> to vector<8xf32>
    %111 = vector.shape_cast %110 : vector<8xf32> to vector<8x1xf32>
    %cst_58 = arith.constant 3.200000e+01 : f32
    %112 = vector.broadcast %cst_58 : f32 to vector<8x1xf32>
    %113 = arith.divf %111, %112 : vector<8x1xf32>
    %114 = vector.broadcast %113 : vector<8x1xf32> to vector<8x32xf32>
    %115 = arith.subf %107, %114 : vector<8x32xf32>
    %116 = arith.mulf %115, %115 : vector<8x32xf32>
    %cst_59 = arith.constant dense<0.000000e+00> : vector<8xf32>
    %117 = vector.multi_reduction <add>, %116, %cst_59 [1] : vector<8x32xf32> to vector<8xf32>
    %118 = vector.shape_cast %117 : vector<8xf32> to vector<8x1xf32>
    %cst_60 = arith.constant 3.200000e+01 : f32
    %119 = vector.broadcast %cst_60 : f32 to vector<8x1xf32>
    %120 = arith.divf %118, %119 : vector<8x1xf32>
    %121 = vector.broadcast %113 : vector<8x1xf32> to vector<8x32xf32>
    %122 = arith.subf %107, %121 : vector<8x32xf32>
    %cst_61 = arith.constant 9.99999974E-6 : f32
    %123 = vector.broadcast %cst_61 : f32 to vector<8x1xf32>
    %124 = arith.addf %120, %123 : vector<8x1xf32>
    %125 = math.rsqrt %124 : vector<8x1xf32>
    %126 = vector.broadcast %125 : vector<8x1xf32> to vector<8x32xf32>
    %127 = arith.mulf %122, %126 : vector<8x32xf32>
    %128 = vector.broadcast %108 : vector<1x32xf32> to vector<8x32xf32>
    %129 = arith.mulf %127, %128 : vector<8x32xf32>
    %130 = vector.broadcast %109 : vector<1x32xf32> to vector<8x32xf32>
    %131 = arith.addf %129, %130 : vector<8x32xf32>
    %c0_62 = arith.constant 0 : index
    %c0_63 = arith.constant 0 : index
    %c0_64 = arith.constant 0 : index
    %132 = vector.load %arg20[%c0_62, %c0_63, %c0_64] : memref<1x8x32xf32, #tpu.memory_space<vmem>>, vector<1x8x32xf32>
    %133 = vector.shape_cast %132 : vector<1x8x32xf32> to vector<8x32xf32>
    %134 = vector.shape_cast %131 : vector<8x32xf32> to vector<1x8x32xf32>
    tpu.vector_store %arg20[%c0_62, %c0_63, %c0_64], %134 {strides = array<i32>} : memref<1x8x32xf32, #tpu.memory_space<vmem>>, vector<1x8x32xf32>,
    return
  }
  func.func @transform_0(%arg0: i32, %arg1: i32) -> (i32, i32, i32) {
    %c0_i32 = arith.constant 0 : i32
    %c0_i32_0 = arith.constant 0 : i32
    return %arg0, %arg1, %c0_i32 : i32, i32, i32
  }
  func.func @transform_1(%arg0: i32, %arg1: i32) -> (i32, i32, i32) {
    %c0_i32 = arith.constant 0 : i32
    %c0_i32_0 = arith.constant 0 : i32
    %c0_i32_1 = arith.constant 0 : i32
    return %arg0, %c0_i32, %c0_i32_0 : i32, i32, i32
  }
  func.func @transform_2(%arg0: i32, %arg1: i32) -> (i32, i32) {
    %c0_i32 = arith.constant 0 : i32
    %c0_i32_0 = arith.constant 0 : i32
    %c0_i32_1 = arith.constant 0 : i32
    return %c0_i32, %c0_i32_0 : i32, i32
  }
  func.func @transform_3(%arg0: i32, %arg1: i32) -> (i32, i32) {
    %c0_i32 = arith.constant 0 : i32
    %c0_i32_0 = arith.constant 0 : i32
    %c0_i32_1 = arith.constant 0 : i32
    return %c0_i32, %c0_i32_0 : i32, i32
  }
  func.func @transform_4(%arg0: i32, %arg1: i32) -> (i32, i32) {
    %c0_i32 = arith.constant 0 : i32
    %c0_i32_0 = arith.constant 0 : i32
    %c0_i32_1 = arith.constant 0 : i32
    return %c0_i32, %c0_i32_0 : i32, i32
  }
  func.func @transform_5(%arg0: i32, %arg1: i32) -> (i32, i32) {
    %c0_i32 = arith.constant 0 : i32
    %c0_i32_0 = arith.constant 0 : i32
    %c0_i32_1 = arith.constant 0 : i32
    return %c0_i32, %c0_i32_0 : i32, i32
  }
  func.func @transform_6(%arg0: i32, %arg1: i32) -> (i32, i32) {
    %c0_i32 = arith.constant 0 : i32
    %c0_i32_0 = arith.constant 0 : i32
    %c0_i32_1 = arith.constant 0 : i32
    return %c0_i32, %c0_i32_0 : i32, i32
  }
  func.func @transform_7(%arg0: i32, %arg1: i32) -> (i32, i32) {
    %c0_i32 = arith.constant 0 : i32
    %c0_i32_0 = arith.constant 0 : i32
    %c0_i32_1 = arith.constant 0 : i32
    return %c0_i32, %c0_i32_0 : i32, i32
  }
  func.func @transform_8(%arg0: i32, %arg1: i32) -> (i32, i32, i32) {
    %c0_i32 = arith.constant 0 : i32
    %c0_i32_0 = arith.constant 0 : i32
    %c0_i32_1 = arith.constant 0 : i32
    %c0_i32_2 = arith.constant 0 : i32
    return %c0_i32, %c0_i32_0, %c0_i32_1 : i32, i32, i32
  }
  func.func @transform_9(%arg0: i32, %arg1: i32) -> (i32, i32) {
    %c0_i32 = arith.constant 0 : i32
    %c0_i32_0 = arith.constant 0 : i32
    %c0_i32_1 = arith.constant 0 : i32
    return %c0_i32, %c0_i32_0 : i32, i32
  }
  func.func @transform_10(%arg0: i32, %arg1: i32) -> (i32, i32) {
    %c0_i32 = arith.constant 0 : i32
    %c0_i32_0 = arith.constant 0 : i32
    %c0_i32_1 = arith.constant 0 : i32
    return %c0_i32, %c0_i32_0 : i32, i32
  }
  func.func @transform_11(%arg0: i32, %arg1: i32) -> (i32, i32) {
    %c0_i32 = arith.constant 0 : i32
    %c0_i32_0 = arith.constant 0 : i32
    %c0_i32_1 = arith.constant 0 : i32
    return %c0_i32, %c0_i32_0 : i32, i32
  }
  func.func @transform_12(%arg0: i32, %arg1: i32) -> (i32, i32) {
    %c0_i32 = arith.constant 0 : i32
    %c0_i32_0 = arith.constant 0 : i32
    %c0_i32_1 = arith.constant 0 : i32
    return %c0_i32, %c0_i32_0 : i32, i32
  }
  func.func @transform_13(%arg0: i32, %arg1: i32) -> (i32, i32) {
    %c0_i32 = arith.constant 0 : i32
    %c0_i32_0 = arith.constant 0 : i32
    %c0_i32_1 = arith.constant 0 : i32
    return %c0_i32, %c0_i32_0 : i32, i32
  }
  func.func @transform_14(%arg0: i32, %arg1: i32) -> (i32, i32) {
    %c0_i32 = arith.constant 0 : i32
    %c0_i32_0 = arith.constant 0 : i32
    %c0_i32_1 = arith.constant 0 : i32
    return %c0_i32, %c0_i32_0 : i32, i32
  }
  func.func @transform_15(%arg0: i32, %arg1: i32) -> (i32, i32) {
    %c0_i32 = arith.constant 0 : i32
    %c0_i32_0 = arith.constant 0 : i32
    %c0_i32_1 = arith.constant 0 : i32
    return %c0_i32, %c0_i32_0 : i32, i32
  }
  func.func @transform_16(%arg0: i32, %arg1: i32) -> (i32, i32) {
    %c0_i32 = arith.constant 0 : i32
    %c0_i32_0 = arith.constant 0 : i32
    %c0_i32_1 = arith.constant 0 : i32
    return %c0_i32, %c0_i32_0 : i32, i32
  }
  func.func @transform_17(%arg0: i32, %arg1: i32) -> (i32, i32) {
    %c0_i32 = arith.constant 0 : i32
    %c0_i32_0 = arith.constant 0 : i32
    %c0_i32_1 = arith.constant 0 : i32
    return %c0_i32, %c0_i32_0 : i32, i32
  }
  func.func @transform_18(%arg0: i32, %arg1: i32) -> (i32, i32, i32) {
    %c0_i32 = arith.constant 0 : i32
    %c0_i32_0 = arith.constant 0 : i32
    return %arg0, %arg1, %c0_i32 : i32, i32, i32
  }
}

</mosaic_0001>

<llo_original>
// kernel: tpu_custom_call.1
$region0: #{tpu_custom_call.1}
  #allocation0 [shape = 'u32[]', space=smem, size = 0x4, offset = 0x4, fixed_abs, tag = 'smem constant byte address 0x4 - core index']
  #allocation1 [shape = 'u32[144,128]{1,0:T(1,128)}', space=vmem, size = 0x12000, scoped, tag = 'internal scratch']
  #allocation2 [shape = 'bf16[4,8,8]{2,1,0:T(8,128)(2,1)}', space=vmem, size = 0x2000, scoped, tag = 'scratch operand']
  #allocation3 [shape = 'bf16[4,8,8]{2,1,0:T(8,128)(2,1)}', space=vmem, size = 0x2000, scoped, tag = 'scratch operand']
  %s0 = inlined_call_operand.hbm [shape: f32[2,8,32], index: 0, kind: input, shape index: {}]
  %s1 = inlined_call_operand.hbm [shape: f32[2,8,32], index: 1, kind: input, shape index: {}]
  %s2 = inlined_call_operand.hbm [shape: bf16[32,32], index: 2, kind: input, shape index: {}]
  %s3 = inlined_call_operand.hbm [shape: f32[1,32], index: 3, kind: input, shape index: {}]
  %s4 = inlined_call_operand.hbm [shape: bf16[32,32], index: 4, kind: input, shape index: {}]
  %s5 = inlined_call_operand.hbm [shape: f32[1,32], index: 5, kind: input, shape index: {}]
  %s6 = inlined_call_operand.hbm [shape: bf16[32,32], index: 6, kind: input, shape index: {}]
  %s7 = inlined_call_operand.hbm [shape: f32[1,32], index: 7, kind: input, shape index: {}]
  %s8 = inlined_call_operand.hbm [shape: bf16[4,8,32], index: 8, kind: input, shape index: {}]
  %s9 = inlined_call_operand.hbm [shape: f32[1,32], index: 9, kind: input, shape index: {}]
  %s10 = inlined_call_operand.hbm [shape: f32[1,32], index: 10, kind: input, shape index: {}]
  %s11 = inlined_call_operand.hbm [shape: f32[1,32], index: 11, kind: input, shape index: {}]
  %s12 = inlined_call_operand.hbm [shape: bf16[32,64], index: 12, kind: input, shape index: {}]
  %s13 = inlined_call_operand.hbm [shape: f32[1,64], index: 13, kind: input, shape index: {}]
  %s14 = inlined_call_operand.hbm [shape: bf16[64,32], index: 14, kind: input, shape index: {}]
  %s15 = inlined_call_operand.hbm [shape: f32[1,32], index: 15, kind: input, shape index: {}]
  %s16 = inlined_call_operand.hbm [shape: f32[1,32], index: 16, kind: input, shape index: {}]
  %s17 = inlined_call_operand.hbm [shape: f32[1,32], index: 17, kind: input, shape index: {}]
  %s18 = inlined_call_operand.hbm [shape: f32[2,8,32], index: 18, kind: output, shape index: {}]
  %s19 = sld [smem:[#allocation0]]
  $region181: #{tpu_custom_call.1} parent=0
    _
  %s21 = ssub.s32 1, %s19
  %s22 = scalar_select 0, %s21, %s19
  $region1: #{tpu_custom_call.1} parent=0
    #allocation4 [shape = 'u8[8192]{0}', space=vmem, size = 0x2000, scoped, tag = 'input window, operand 0']
    #allocation5 [shape = 's32[2]{0}', space=sflag, size = 0x8, scoped, tag = 'scoped memory for tpu_custom_call.1']
    #allocation6 [shape = 's32[2]{0}', space=sflag, size = 0x8, scoped, tag = 'scoped memory for tpu_custom_call.1']
    #allocation7 [shape = 'u8[8192]{0}', space=vmem, size = 0x2000, scoped, tag = 'input window, operand 1']
    #allocation8 [shape = 's32[2]{0}', space=sflag, size = 0x8, scoped, tag = 'scoped memory for tpu_custom_call.1']
    #allocation9 [shape = 'u8[8192]{0}', space=vmem, size = 0x2000, scoped, tag = 'input window, operand 2, single buffered']
    #allocation10 [shape = 'u8[512]{0}', space=vmem, size = 0x400, scoped, tag = 'input window, operand 3, single buffered']
    #allocation11 [shape = 's32[1]{0}', space=sflag, size = 0x4, scoped, tag = 'scoped memory for tpu_custom_call.1']
    #allocation12 [shape = 'u8[8192]{0}', space=vmem, size = 0x2000, scoped, tag = 'input window, operand 4, single buffered']
    #allocation13 [shape = 'u8[512]{0}', space=vmem, size = 0x400, scoped, tag = 'input window, operand 5, single buffered']
    #allocation14 [shape = 's32[1]{0}', space=sflag, size = 0x4, scoped, tag = 'scoped memory for tpu_custom_call.1']
    #allocation15 [shape = 'u8[8192]{0}', space=vmem, size = 0x2000, scoped, tag = 'input window, operand 6, single buffered']
    #allocation16 [shape = 'u8[512]{0}', space=vmem, size = 0x400, scoped, tag = 'input window, operand 7, single buffered']
    #allocation17 [shape = 's32[1]{0}', space=sflag, size = 0x4, scoped, tag = 'scoped memory for tpu_custom_call.1']
    #allocation18 [shape = 'u8[8192]{0}', space=vmem, size = 0x2000, scoped, tag = 'input window, operand 8, single buffered']
    #allocation19 [shape = 'u8[512]{0}', space=vmem, size = 0x400, scoped, tag = 'input window, operand 9, single buffered']
    #allocation20 [shape = 's32[1]{0}', space=sflag, size = 0x4, scoped, tag = 'scoped memory for tpu_custom_call.1']
    #allocation21 [shape = 'u8[512]{0}', space=vmem, size = 0x400, scoped, tag = 'input window, operand 10, single buffered']
    #allocation22 [shape = 'u8[512]{0}', space=vmem, size = 0x400, scoped, tag = 'input window, operand 11, single buffered']
    #allocation23 [shape = 's32[1]{0}', space=sflag, size = 0x4, scoped, tag = 'scoped memory for tpu_custom_call.1']
    #allocation24 [shape = 'u8[8192]{0}', space=vmem, size = 0x2000, scoped, tag = 'input window, operand 12, single buffered']
    #allocation25 [shape = 'u8[512]{0}', space=vmem, size = 0x400, scoped, tag = 'input window, operand 13, single buffered']
    #allocation26 [shape = 's32[1]{0}', space=sflag, size = 0x4, scoped, tag = 'scoped memory for tpu_custom_call.1']
    #allocation27 [shape = 'u8[16384]{0}', space=vmem, size = 0x4000, scoped, tag = 'input window, operand 14, single buffered']
    #allocation28 [shape = 'u8[512]{0}', space=vmem, size = 0x400, scoped, tag = 'input window, operand 15, single buffered']
    #allocation29 [shape = 's32[1]{0}', space=sflag, size = 0x4, scoped, tag = 'scoped memory for tpu_custom_call.1']
    #allocation30 [shape = 'u8[512]{0}', space=vmem, size = 0x400, scoped, tag = 'input window, operand 16, single buffered']
    #allocation31 [shape = 'u8[512]{0}', space=vmem, size = 0x400, scoped, tag = 'input window, operand 17, single buffered']
    #allocation32 [shape = 's32[1]{0}', space=sflag, size = 0x4, scoped, tag = 'scoped memory for tpu_custom_call.1']
    #allocation33 [shape = 'u8[8192]{0}', space=vmem, size = 0x2000, scoped, tag = 'output window, operand 0']
    %23 = vsyncpa [#allocation5], 0
    %s24 = scalar_lea.sflag [#allocation5], 1
    %25 = vsyncpa %s24, 0
    %26 = vsyncpa [#allocation8], 0
    %s27 = scalar_lea.sflag [#allocation8], 1
    %28 = vsyncpa %s27, 0
    %29 = vsyncpa [#allocation11], 0
    %30 = vsyncpa [#allocation14], 0
    %31 = vsyncpa [#allocation17], 0
    %32 = vsyncpa [#allocation20], 0
    %33 = vsyncpa [#allocation23], 0
    %34 = vsyncpa [#allocation26], 0
    %35 = vsyncpa [#allocation29], 0
    %36 = vsyncpa [#allocation32], 0
    %37 = vsyncpa [#allocation6], 0
    %s38 = scalar_lea.sflag [#allocation6], 1
    %39 = vsyncpa %s38, 0
    loop: start=0, step=1, limit=4
    $region2: #{tpu_custom_call.1} parent=1 // loop_pre_header
      _
    $region3: #{tpu_custom_call.1} parent=1 // loop_header
      %s41 = sphi 0, %s45
      %p42 = scmp.ge.s32.totalorder %s41, 4
      %s48 = sphi 0, %s60
      %s49 = sphi 0, %s56
      %s50 = sphi 0, %s48
      %s51 = sphi 0, %s49
      %s52 = sphi 0, %s50
      %s53 = sphi 0, %s51
      %s65 = sphi 0, %s67
      %s68 = sphi 0, %s65
      %s69 = sphi 0, %s68
      %s85 = sphi 0, %s69
      %s91 = sphi 0, %s93
      %s94 = sphi 0, %s91
      %s95 = sphi 0, %s94
      %s111 = sphi 0, %s95
      %s115 = sphi 0, %s115
      %s117 = sphi 0, %s115
      %s118 = sphi 0, %s117
      %s132 = sphi 0, %s118
      %s136 = sphi 0, %s136
      %s138 = sphi 0, %s136
      %s139 = sphi 0, %s138
      %s153 = sphi 0, %s139
      %s157 = sphi 0, %s157
      %s159 = sphi 0, %s157
      %s160 = sphi 0, %s159
      %s174 = sphi 0, %s160
      %s178 = sphi 0, %s178
      %s180 = sphi 0, %s178
      %s181 = sphi 0, %s180
      %s195 = sphi 0, %s181
      %s199 = sphi 0, %s199
      %s201 = sphi 0, %s199
      %s202 = sphi 0, %s201
      %s216 = sphi 0, %s202
      %s220 = sphi 0, %s220
      %s222 = sphi 0, %s220
      %s223 = sphi 0, %s222
      %s237 = sphi 0, %s223
      %s241 = sphi 0, %s241
      %s243 = sphi 0, %s241
      %s244 = sphi 0, %s243
      %s258 = sphi 0, %s244
      %s262 = sphi 0, %s262
      %s264 = sphi 0, %s262
      %s265 = sphi 0, %s264
      %s279 = sphi 0, %s265
      %s283 = sphi 0, %s283
      %s285 = sphi 0, %s283
      %s286 = sphi 0, %s285
      %s300 = sphi 0, %s286
      %s304 = sphi 0, %s304
      %s306 = sphi 0, %s304
      %s307 = sphi 0, %s306
      %s321 = sphi 0, %s307
      %s325 = sphi 0, %s325
      %s327 = sphi 0, %s325
      %s328 = sphi 0, %s327
      %s342 = sphi 0, %s328
      %s346 = sphi 0, %s346
      %s348 = sphi 0, %s346
      %s349 = sphi 0, %s348
      %s363 = sphi 0, %s349
      %s367 = sphi 0, %s367
      %s369 = sphi 0, %s367
      %s370 = sphi 0, %s369
      %s384 = sphi 0, %s370
      %s388 = sphi 0, %s388
      %s390 = sphi 0, %s388
      %s391 = sphi 0, %s390
      %s405 = sphi 0, %s391
      %s409 = sphi 0, %s409
      %s411 = sphi 0, %s409
      %s412 = sphi 0, %s411
      %s426 = sphi 0, %s412
      %s430 = sphi 0, %s430
      %s432 = sphi 0, %s430
      %s433 = sphi 0, %s432
      %s447 = sphi 0, %s433
      %s455 = sphi 0, %s457
      %s458 = sphi 0, %s455
      %s459 = sphi 0, %s458
      %s475 = sphi 0, %s459
    $region4: #{tpu_custom_call.1} parent=1 // loop_header_branch
      %44 = sbr.rel (%p42) target = $region8
    $region5: #{tpu_custom_call.1} parent=1 // loop_body
      %s46 = ssub.s32 %s41, 1
      %s47 = ssub.s32 %s41, 2
      %s54 = sadd.s32 1, %s49
      %p55 = scmp.ge.s32.totalorder %s54, 1
      %s56 = scalar_select %p55, 0, %s54
      %s57 = sadd.s32 1, %s48
      %s58 = scalar_select %p55, %s57, %s48
      %p59 = scmp.ge.s32.totalorder %s58, 2
      %s60 = scalar_select %p59, 0, %s58
      %s61 = ssub.s32 %s48, %s60
      %s62 = ssub.s32 %s49, %s56
      %s63 = sor.u32 %s61, %s62
      %p64 = scmp.eq.s32.totalorder %s63, 0
      %s66 = sadd.s32 %s65, 1
      %s67 = scalar_select %p64, %s65, %s66
      %p70 = pneg %p64
      %p71 = scmp.eq.s32.totalorder %s41, 1
      %p72 = por %p70, %p71
      %p73 = scmp.ne.s32.totalorder %s65, %s68
      %p74 = scmp.eq.s32.totalorder %s41, 0
      %p75 = por %p73, %p74
      %p76 = scmp.ne.s32.totalorder %s65, %s68
      %p77 = scmp.eq.s32.totalorder %s46, 1
      %p78 = por %p76, %p77
      %p79 = scmp.ne.s32.totalorder %s68, %s69
      %p80 = scmp.eq.s32.totalorder %s46, 0
      %p81 = por %p79, %p80
      %p82 = scmp.ne.s32.totalorder %s68, %s69
      %p83 = scmp.eq.s32.totalorder %s47, 1
      %p84 = por %p82, %p83
      %p86 = scmp.ne.s32.totalorder %s69, %s85
      %p87 = scmp.eq.s32.totalorder %s47, 0
      %p88 = por %p86, %p87
      %s89 = ssub.s32 %s48, %s60
      %p90 = scmp.eq.s32.totalorder %s89, 0
      %s92 = sadd.s32 %s91, 1
      %s93 = scalar_select %p90, %s91, %s92
      %p96 = pneg %p90
      %p97 = scmp.eq.s32.totalorder %s41, 1
      %p98 = por %p96, %p97
      %p99 = scmp.ne.s32.totalorder %s91, %s94
      %p100 = scmp.eq.s32.totalorder %s41, 0
      %p101 = por %p99, %p100
      %p102 = scmp.ne.s32.totalorder %s91, %s94
      %p103 = scmp.eq.s32.totalorder %s46, 1
      %p104 = por %p102, %p103
      %p105 = scmp.ne.s32.totalorder %s94, %s95
      %p106 = scmp.eq.s32.totalorder %s46, 0
      %p107 = por %p105, %p106
      %p108 = scmp.ne.s32.totalorder %s94, %s95
      %p109 = scmp.eq.s32.totalorder %s47, 1
      %p110 = por %p108, %p109
      %p112 = scmp.ne.s32.totalorder %s95, %s111
      %p113 = scmp.eq.s32.totalorder %s47, 0
      %p114 = por %p112, %p113
      %s116 = sadd.s32 %s115, 1
      %p119 = scmp.eq.s32.totalorder %s41, 1
      %p120 = scmp.ne.s32.totalorder %s115, %s117
      %p121 = scmp.eq.s32.totalorder %s41, 0
      %p122 = por %p120, %p121
      %p123 = scmp.ne.s32.totalorder %s115, %s117
      %p124 = scmp.eq.s32.totalorder %s46, 1
      %p125 = por %p123, %p124
      %p126 = scmp.ne.s32.totalorder %s117, %s118
      %p127 = scmp.eq.s32.totalorder %s46, 0
      %p128 = por %p126, %p127
      %p129 = scmp.ne.s32.totalorder %s117, %s118
      %p130 = scmp.eq.s32.totalorder %s47, 1
      %p131 = por %p129, %p130
      %p133 = scmp.ne.s32.totalorder %s118, %s132
      %p134 = scmp.eq.s32.totalorder %s47, 0
      %p135 = por %p133, %p134
      %s137 = sadd.s32 %s136, 1
      %p140 = scmp.eq.s32.totalorder %s41, 1
      %p141 = scmp.ne.s32.totalorder %s136, %s138
      %p142 = scmp.eq.s32.totalorder %s41, 0
      %p143 = por %p141, %p142
      %p144 = scmp.ne.s32.totalorder %s136, %s138
      %p145 = scmp.eq.s32.totalorder %s46, 1
      %p146 = por %p144, %p145
      %p147 = scmp.ne.s32.totalorder %s138, %s139
      %p148 = scmp.eq.s32.totalorder %s46, 0
      %p149 = por %p147, %p148
      %p150 = scmp.ne.s32.totalorder %s138, %s139
      %p151 = scmp.eq.s32.totalorder %s47, 1
      %p152 = por %p150, %p151
      %p154 = scmp.ne.s32.totalorder %s139, %s153
      %p155 = scmp.eq.s32.totalorder %s47, 0
      %p156 = por %p154, %p155
      %s158 = sadd.s32 %s157, 1
      %p161 = scmp.eq.s32.totalorder %s41, 1
      %p162 = scmp.ne.s32.totalorder %s157, %s159
      %p163 = scmp.eq.s32.totalorder %s41, 0
      %p164 = por %p162, %p163
      %p165 = scmp.ne.s32.totalorder %s157, %s159
      %p166 = scmp.eq.s32.totalorder %s46, 1
      %p167 = por %p165, %p166
      %p168 = scmp.ne.s32.totalorder %s159, %s160
      %p169 = scmp.eq.s32.totalorder %s46, 0
      %p170 = por %p168, %p169
      %p171 = scmp.ne.s32.totalorder %s159, %s160
      %p172 = scmp.eq.s32.totalorder %s47, 1
      %p173 = por %p171, %p172
      %p175 = scmp.ne.s32.totalorder %s160, %s174
      %p176 = scmp.eq.s32.totalorder %s47, 0
      %p177 = por %p175, %p176
      %s179 = sadd.s32 %s178, 1
      %p182 = scmp.eq.s32.totalorder %s41, 1
      %p183 = scmp.ne.s32.totalorder %s178, %s180
      %p184 = scmp.eq.s32.totalorder %s41, 0
      %p185 = por %p183, %p184
      %p186 = scmp.ne.s32.totalorder %s178, %s180
      %p187 = scmp.eq.s32.totalorder %s46, 1
      %p188 = por %p186, %p187
      %p189 = scmp.ne.s32.totalorder %s180, %s181
      %p190 = scmp.eq.s32.totalorder %s46, 0
      %p191 = por %p189, %p190
      %p192 = scmp.ne.s32.totalorder %s180, %s181
      %p193 = scmp.eq.s32.totalorder %s47, 1
      %p194 = por %p192, %p193
      %p196 = scmp.ne.s32.totalorder %s181, %s195
      %p197 = scmp.eq.s32.totalorder %s47, 0
      %p198 = por %p196, %p197
      %s200 = sadd.s32 %s199, 1
      %p203 = scmp.eq.s32.totalorder %s41, 1
      %p204 = scmp.ne.s32.totalorder %s199, %s201
      %p205 = scmp.eq.s32.totalorder %s41, 0
      %p206 = por %p204, %p205
      %p207 = scmp.ne.s32.totalorder %s199, %s201
      %p208 = scmp.eq.s32.totalorder %s46, 1
      %p209 = por %p207, %p208
      %p210 = scmp.ne.s32.totalorder %s201, %s202
      %p211 = scmp.eq.s32.totalorder %s46, 0
      %p212 = por %p210, %p211
      %p213 = scmp.ne.s32.totalorder %s201, %s202
      %p214 = scmp.eq.s32.totalorder %s47, 1
      %p215 = por %p213, %p214
      %p217 = scmp.ne.s32.totalorder %s202, %s216
      %p218 = scmp.eq.s32.totalorder %s47, 0
      %p219 = por %p217, %p218
      %s221 = sadd.s32 %s220, 1
      %p224 = scmp.eq.s32.totalorder %s41, 1
      %p225 = scmp.ne.s32.totalorder %s220, %s222
      %p226 = scmp.eq.s32.totalorder %s41, 0
      %p227 = por %p225, %p226
      %p228 = scmp.ne.s32.totalorder %s220, %s222
      %p229 = scmp.eq.s32.totalorder %s46, 1
      %p230 = por %p228, %p229
      %p231 = scmp.ne.s32.totalorder %s222, %s223
      %p232 = scmp.eq.s32.totalorder %s46, 0
      %p233 = por %p231, %p232
      %p234 = scmp.ne.s32.totalorder %s222, %s223
      %p235 = scmp.eq.s32.totalorder %s47, 1
      %p236 = por %p234, %p235
      %p238 = scmp.ne.s32.totalorder %s223, %s237
      %p239 = scmp.eq.s32.totalorder %s47, 0
      %p240 = por %p238, %p239
      %s242 = sadd.s32 %s241, 1
      %p245 = scmp.eq.s32.totalorder %s41, 1
      %p246 = scmp.ne.s32.totalorder %s241, %s243
      %p247 = scmp.eq.s32.totalorder %s41, 0
      %p248 = por %p246, %p247
      %p249 = scmp.ne.s32.totalorder %s241, %s243
      %p250 = scmp.eq.s32.totalorder %s46, 1
      %p251 = por %p249, %p250
      %p252 = scmp.ne.s32.totalorder %s243, %s244
      %p253 = scmp.eq.s32.totalorder %s46, 0
      %p254 = por %p252, %p253
      %p255 = scmp.ne.s32.totalorder %s243, %s244
      %p256 = scmp.eq.s32.totalorder %s47, 1
      %p257 = por %p255, %p256
      %p259 = scmp.ne.s32.totalorder %s244, %s258
      %p260 = scmp.eq.s32.totalorder %s47, 0
      %p261 = por %p259, %p260
      %s263 = sadd.s32 %s262, 1
      %p266 = scmp.eq.s32.totalorder %s41, 1
      %p267 = scmp.ne.s32.totalorder %s262, %s264
      %p268 = scmp.eq.s32.totalorder %s41, 0
      %p269 = por %p267, %p268
      %p270 = scmp.ne.s32.totalorder %s262, %s264
      %p271 = scmp.eq.s32.totalorder %s46, 1
      %p272 = por %p270, %p271
      %p273 = scmp.ne.s32.totalorder %s264, %s265
      %p274 = scmp.eq.s32.totalorder %s46, 0
      %p275 = por %p273, %p274
      %p276 = scmp.ne.s32.totalorder %s264, %s265
      %p277 = scmp.eq.s32.totalorder %s47, 1
      %p278 = por %p276, %p277
      %p280 = scmp.ne.s32.totalorder %s265, %s279
      %p281 = scmp.eq.s32.totalorder %s47, 0
      %p282 = por %p280, %p281
      %s284 = sadd.s32 %s283, 1
      %p287 = scmp.eq.s32.totalorder %s41, 1
      %p288 = scmp.ne.s32.totalorder %s283, %s285
      %p289 = scmp.eq.s32.totalorder %s41, 0
      %p290 = por %p288, %p289
      %p291 = scmp.ne.s32.totalorder %s283, %s285
      %p292 = scmp.eq.s32.totalorder %s46, 1
      %p293 = por %p291, %p292
      %p294 = scmp.ne.s32.totalorder %s285, %s286
      %p295 = scmp.eq.s32.totalorder %s46, 0
      %p296 = por %p294, %p295
      %p297 = scmp.ne.s32.totalorder %s285, %s286
      %p298 = scmp.eq.s32.totalorder %s47, 1
      %p299 = por %p297, %p298
      %p301 = scmp.ne.s32.totalorder %s286, %s300
      %p302 = scmp.eq.s32.totalorder %s47, 0
      %p303 = por %p301, %p302
      %s305 = sadd.s32 %s304, 1
      %p308 = scmp.eq.s32.totalorder %s41, 1
      %p309 = scmp.ne.s32.totalorder %s304, %s306
      %p310 = scmp.eq.s32.totalorder %s41, 0
      %p311 = por %p309, %p310
      %p312 = scmp.ne.s32.totalorder %s304, %s306
      %p313 = scmp.eq.s32.totalorder %s46, 1
      %p314 = por %p312, %p313
      %p315 = scmp.ne.s32.totalorder %s306, %s307
      %p316 = scmp.eq.s32.totalorder %s46, 0
      %p317 = por %p315, %p316
      %p318 = scmp.ne.s32.totalorder %s306, %s307
      %p319 = scmp.eq.s32.totalorder %s47, 1
      %p320 = por %p318, %p319
      %p322 = scmp.ne.s32.totalorder %s307, %s321
      %p323 = scmp.eq.s32.totalorder %s47, 0
      %p324 = por %p322, %p323
      %s326 = sadd.s32 %s325, 1
      %p329 = scmp.eq.s32.totalorder %s41, 1
      %p330 = scmp.ne.s32.totalorder %s325, %s327
      %p331 = scmp.eq.s32.totalorder %s41, 0
      %p332 = por %p330, %p331
      %p333 = scmp.ne.s32.totalorder %s325, %s327
      %p334 = scmp.eq.s32.totalorder %s46, 1
      %p335 = por %p333, %p334
      %p336 = scmp.ne.s32.totalorder %s327, %s328
      %p337 = scmp.eq.s32.totalorder %s46, 0
      %p338 = por %p336, %p337
      %p339 = scmp.ne.s32.totalorder %s327, %s328
      %p340 = scmp.eq.s32.totalorder %s47, 1
      %p341 = por %p339, %p340
      %p343 = scmp.ne.s32.totalorder %s328, %s342
      %p344 = scmp.eq.s32.totalorder %s47, 0
      %p345 = por %p343, %p344
      %s347 = sadd.s32 %s346, 1
      %p350 = scmp.eq.s32.totalorder %s41, 1
      %p351 = scmp.ne.s32.totalorder %s346, %s348
      %p352 = scmp.eq.s32.totalorder %s41, 0
      %p353 = por %p351, %p352
      %p354 = scmp.ne.s32.totalorder %s346, %s348
      %p355 = scmp.eq.s32.totalorder %s46, 1
      %p356 = por %p354, %p355
      %p357 = scmp.ne.s32.totalorder %s348, %s349
      %p358 = scmp.eq.s32.totalorder %s46, 0
      %p359 = por %p357, %p358
      %p360 = scmp.ne.s32.totalorder %s348, %s349
      %p361 = scmp.eq.s32.totalorder %s47, 1
      %p362 = por %p360, %p361
      %p364 = scmp.ne.s32.totalorder %s349, %s363
      %p365 = scmp.eq.s32.totalorder %s47, 0
      %p366 = por %p364, %p365
      %s368 = sadd.s32 %s367, 1
      %p371 = scmp.eq.s32.totalorder %s41, 1
      %p372 = scmp.ne.s32.totalorder %s367, %s369
      %p373 = scmp.eq.s32.totalorder %s41, 0
      %p374 = por %p372, %p373
      %p375 = scmp.ne.s32.totalorder %s367, %s369
      %p376 = scmp.eq.s32.totalorder %s46, 1
      %p377 = por %p375, %p376
      %p378 = scmp.ne.s32.totalorder %s369, %s370
      %p379 = scmp.eq.s32.totalorder %s46, 0
      %p380 = por %p378, %p379
      %p381 = scmp.ne.s32.totalorder %s369, %s370
      %p382 = scmp.eq.s32.totalorder %s47, 1
      %p383 = por %p381, %p382
      %p385 = scmp.ne.s32.totalorder %s370, %s384
      %p386 = scmp.eq.s32.totalorder %s47, 0
      %p387 = por %p385, %p386
      %s389 = sadd.s32 %s388, 1
      %p392 = scmp.eq.s32.totalorder %s41, 1
      %p393 = scmp.ne.s32.totalorder %s388, %s390
      %p394 = scmp.eq.s32.totalorder %s41, 0
      %p395 = por %p393, %p394
      %p396 = scmp.ne.s32.totalorder %s388, %s390
      %p397 = scmp.eq.s32.totalorder %s46, 1
      %p398 = por %p396, %p397
      %p399 = scmp.ne.s32.totalorder %s390, %s391
      %p400 = scmp.eq.s32.totalorder %s46, 0
      %p401 = por %p399, %p400
      %p402 = scmp.ne.s32.totalorder %s390, %s391
      %p403 = scmp.eq.s32.totalorder %s47, 1
      %p404 = por %p402, %p403
      %p406 = scmp.ne.s32.totalorder %s391, %s405
      %p407 = scmp.eq.s32.totalorder %s47, 0
      %p408 = por %p406, %p407
      %s410 = sadd.s32 %s409, 1
      %p413 = scmp.eq.s32.totalorder %s41, 1
      %p414 = scmp.ne.s32.totalorder %s409, %s411
      %p415 = scmp.eq.s32.totalorder %s41, 0
      %p416 = por %p414, %p415
      %p417 = scmp.ne.s32.totalorder %s409, %s411
      %p418 = scmp.eq.s32.totalorder %s46, 1
      %p419 = por %p417, %p418
      %p420 = scmp.ne.s32.totalorder %s411, %s412
      %p421 = scmp.eq.s32.totalorder %s46, 0
      %p422 = por %p420, %p421
      %p423 = scmp.ne.s32.totalorder %s411, %s412
      %p424 = scmp.eq.s32.totalorder %s47, 1
      %p425 = por %p423, %p424
      %p427 = scmp.ne.s32.totalorder %s412, %s426
      %p428 = scmp.eq.s32.totalorder %s47, 0
      %p429 = por %p427, %p428
      %s431 = sadd.s32 %s430, 1
      %p434 = scmp.eq.s32.totalorder %s41, 1
      %p435 = scmp.ne.s32.totalorder %s430, %s432
      %p436 = scmp.eq.s32.totalorder %s41, 0
      %p437 = por %p435, %p436
      %p438 = scmp.ne.s32.totalorder %s430, %s432
      %p439 = scmp.eq.s32.totalorder %s46, 1
      %p440 = por %p438, %p439
      %p441 = scmp.ne.s32.totalorder %s432, %s433
      %p442 = scmp.eq.s32.totalorder %s46, 0
      %p443 = por %p441, %p442
      %p444 = scmp.ne.s32.totalorder %s432, %s433
      %p445 = scmp.eq.s32.totalorder %s47, 1
      %p446 = por %p444, %p445
      %p448 = scmp.ne.s32.totalorder %s433, %s447
      %p449 = scmp.eq.s32.totalorder %s47, 0
      %p450 = por %p448, %p449
      %s451 = ssub.s32 %s48, %s60
      %s452 = ssub.s32 %s49, %s56
      %s453 = sor.u32 %s451, %s452
      %p454 = scmp.eq.s32.totalorder %s453, 0
      %s456 = sadd.s32 %s455, 1
      %s457 = scalar_select %p454, %s455, %s456
      %p460 = pneg %p454
      %p461 = scmp.eq.s32.totalorder %s41, 1
      %p462 = por %p460, %p461
      %p463 = scmp.ne.s32.totalorder %s455, %s458
      %p464 = scmp.eq.s32.totalorder %s41, 0
      %p465 = por %p463, %p464
      %p466 = scmp.ne.s32.totalorder %s455, %s458
      %p467 = scmp.eq.s32.totalorder %s46, 1
      %p468 = por %p466, %p467
      %p469 = scmp.ne.s32.totalorder %s458, %s459
      %p470 = scmp.eq.s32.totalorder %s46, 0
      %p471 = por %p469, %p470
      %p472 = scmp.ne.s32.totalorder %s458, %s459
      %p473 = scmp.eq.s32.totalorder %s47, 1
      %p474 = por %p472, %p473
      %p476 = scmp.ne.s32.totalorder %s459, %s475
      %p477 = scmp.eq.s32.totalorder %s47, 0
      %p478 = por %p476, %p477
      %p479 = scmp.le.s32.totalorder 1, %s41
      %p480 = scmp.lt.s32.totalorder %s41, 3
      %p481 = pnand %p479, %p480
      %p482 = pneg %p481
      // Predicated region
      $region9: #{tpu_custom_call.1} parent=5 // pred_check
        _
      $region10: #{tpu_custom_call.1} parent=5 // pred_check_branch
        %484 = sbr.rel (%p481) target = $region12
      $region11: #{tpu_custom_call.1} parent=5 // pred_region
        %s485 = ssub.s32 %s41, 1
        // Predicated region
        $region13: #{tpu_custom_call.1} parent=11 // pred_check
          %p486 = pneg %p128
        $region14: #{tpu_custom_call.1} parent=11 // pred_check_branch
          %488 = sbr.rel (%p486) target = $region16
        $region15: #{tpu_custom_call.1} parent=11 // pred_region
          %s490 = ssub.s32 256, 256
          %491 = vsyncadd [#allocation8], %s490
          %s492 = sshll.u32 [#allocation9], 4
          %s493 = int_to_ptr.vmem [resolvable:$true] %s492
          %498 = dma.hbm_to_vmem [thread:$0]  %s2, 256, %s493, [#allocation8], 64, 64, 4
        $region16: #{tpu_custom_call.1} parent=11 // pred_fallthru
          _
        // Predicated region
        $region17: #{tpu_custom_call.1} parent=11 // pred_check
          %p499 = pneg %p149
        $region18: #{tpu_custom_call.1} parent=11 // pred_check_branch
          %501 = sbr.rel (%p499) target = $region20
        $region19: #{tpu_custom_call.1} parent=11 // pred_region
          %s503 = ssub.s32 16, 16
          %504 = vsyncadd [#allocation11], %s503
          %s506 = sshll.u32 [#allocation10], 4
          %s507 = int_to_ptr.vmem [resolvable:$true] %s506
          %509 = dma.hbm_to_vmem [thread:$0]  %s3, 16, %s507, [#allocation11]
        $region20: #{tpu_custom_call.1} parent=11 // pred_fallthru
          _
        // Predicated region
        $region21: #{tpu_custom_call.1} parent=11 // pred_check
          %p510 = pneg %p170
        $region22: #{tpu_custom_call.1} parent=11 // pred_check_branch
          %512 = sbr.rel (%p510) target = $region24
        $region23: #{tpu_custom_call.1} parent=11 // pred_region
          %s514 = ssub.s32 256, 256
          %515 = vsyncadd [#allocation11], %s514
          %s516 = sshll.u32 [#allocation12], 4
          %s517 = int_to_ptr.vmem [resolvable:$true] %s516
          %522 = dma.hbm_to_vmem [thread:$0]  %s4, 256, %s517, [#allocation11], 64, 64, 4
        $region24: #{tpu_custom_call.1} parent=11 // pred_fallthru
          _
        // Predicated region
        $region25: #{tpu_custom_call.1} parent=11 // pred_check
          %p523 = pneg %p191
        $region26: #{tpu_custom_call.1} parent=11 // pred_check_branch
          %525 = sbr.rel (%p523) target = $region28
        $region27: #{tpu_custom_call.1} parent=11 // pred_region
          %s527 = ssub.s32 16, 16
          %528 = vsyncadd [#allocation14], %s527
          %s530 = sshll.u32 [#allocation13], 4
          %s531 = int_to_ptr.vmem [resolvable:$true] %s530
          %533 = dma.hbm_to_vmem [thread:$0]  %s5, 16, %s531, [#allocation14]
        $region28: #{tpu_custom_call.1} parent=11 // pred_fallthru
          _
        // Predicated region
        $region29: #{tpu_custom_call.1} parent=11 // pred_check
          %p534 = pneg %p212
        $region30: #{tpu_custom_call.1} parent=11 // pred_check_branch
          %536 = sbr.rel (%p534) target = $region32
        $region31: #{tpu_custom_call.1} parent=11 // pred_region
          %s538 = ssub.s32 256, 256
          %539 = vsyncadd [#allocation14], %s538
          %s540 = sshll.u32 [#allocation15], 4
          %s541 = int_to_ptr.vmem [resolvable:$true] %s540
          %546 = dma.hbm_to_vmem [thread:$0]  %s6, 256, %s541, [#allocation14], 64, 64, 4
        $region32: #{tpu_custom_call.1} parent=11 // pred_fallthru
          _
        // Predicated region
        $region33: #{tpu_custom_call.1} parent=11 // pred_check
          %p547 = pneg %p233
        $region34: #{tpu_custom_call.1} parent=11 // pred_check_branch
          %549 = sbr.rel (%p547) target = $region36
        $region35: #{tpu_custom_call.1} parent=11 // pred_region
          %s551 = ssub.s32 16, 16
          %552 = vsyncadd [#allocation17], %s551
          %s554 = sshll.u32 [#allocation16], 4
          %s555 = int_to_ptr.vmem [resolvable:$true] %s554
          %557 = dma.hbm_to_vmem [thread:$0]  %s7, 16, %s555, [#allocation17]
        $region36: #{tpu_custom_call.1} parent=11 // pred_fallthru
          _
        // Predicated region
        $region37: #{tpu_custom_call.1} parent=11 // pred_check
          %p558 = pneg %p254
        $region38: #{tpu_custom_call.1} parent=11 // pred_check_branch
          %560 = sbr.rel (%p558) target = $region40
        $region39: #{tpu_custom_call.1} parent=11 // pred_region
          %s562 = ssub.s32 256, 256
          %563 = vsyncadd [#allocation17], %s562
          %s564 = sshll.u32 [#allocation18], 4
          %s565 = int_to_ptr.vmem [resolvable:$true] %s564
          %570 = dma.hbm_to_vmem [thread:$0]  %s8, 256, %s565, [#allocation17], 64, 64, 4
        $region40: #{tpu_custom_call.1} parent=11 // pred_fallthru
          _
        // Predicated region
        $region41: #{tpu_custom_call.1} parent=11 // pred_check
          %p571 = pneg %p275
        $region42: #{tpu_custom_call.1} parent=11 // pred_check_branch
          %573 = sbr.rel (%p571) target = $region44
        $region43: #{tpu_custom_call.1} parent=11 // pred_region
          %s575 = ssub.s32 16, 16
          %576 = vsyncadd [#allocation20], %s575
          %s578 = sshll.u32 [#allocation19], 4
          %s579 = int_to_ptr.vmem [resolvable:$true] %s578
          %581 = dma.hbm_to_vmem [thread:$0]  %s9, 16, %s579, [#allocation20]
        $region44: #{tpu_custom_call.1} parent=11 // pred_fallthru
          _
        // Predicated region
        $region45: #{tpu_custom_call.1} parent=11 // pred_check
          %p582 = pneg %p296
        $region46: #{tpu_custom_call.1} parent=11 // pred_check_branch
          %584 = sbr.rel (%p582) target = $region48
        $region47: #{tpu_custom_call.1} parent=11 // pred_region
          %s586 = ssub.s32 16, 16
          %587 = vsyncadd [#allocation20], %s586
          %s589 = sshll.u32 [#allocation21], 4
          %s590 = int_to_ptr.vmem [resolvable:$true] %s589
          %592 = dma.hbm_to_vmem [thread:$0]  %s10, 16, %s590, [#allocation20]
        $region48: #{tpu_custom_call.1} parent=11 // pred_fallthru
          _
        // Predicated region
        $region49: #{tpu_custom_call.1} parent=11 // pred_check
          %p593 = pneg %p317
        $region50: #{tpu_custom_call.1} parent=11 // pred_check_branch
          %595 = sbr.rel (%p593) target = $region52
        $region51: #{tpu_custom_call.1} parent=11 // pred_region
          %s597 = ssub.s32 16, 16
          %598 = vsyncadd [#allocation23], %s597
          %s600 = sshll.u32 [#allocation22], 4
          %s601 = int_to_ptr.vmem [resolvable:$true] %s600
          %603 = dma.hbm_to_vmem [thread:$0]  %s11, 16, %s601, [#allocation23]
        $region52: #{tpu_custom_call.1} parent=11 // pred_fallthru
          _
        // Predicated region
        $region53: #{tpu_custom_call.1} parent=11 // pred_check
          %p604 = pneg %p338
        $region54: #{tpu_custom_call.1} parent=11 // pred_check_branch
          %606 = sbr.rel (%p604) target = $region56
        $region55: #{tpu_custom_call.1} parent=11 // pred_region
          %s608 = ssub.s32 256, 256
          %609 = vsyncadd [#allocation23], %s608
          %s610 = sshll.u32 [#allocation24], 4
          %s611 = int_to_ptr.vmem [resolvable:$true] %s610
          %616 = dma.hbm_to_vmem [thread:$0]  %s12, 256, %s611, [#allocation23], 64, 64, 4
        $region56: #{tpu_custom_call.1} parent=11 // pred_fallthru
          _
        // Predicated region
        $region57: #{tpu_custom_call.1} parent=11 // pred_check
          %p617 = pneg %p359
        $region58: #{tpu_custom_call.1} parent=11 // pred_check_branch
          %619 = sbr.rel (%p617) target = $region60
        $region59: #{tpu_custom_call.1} parent=11 // pred_region
          %s621 = ssub.s32 16, 16
          %622 = vsyncadd [#allocation26], %s621
          %s624 = sshll.u32 [#allocation25], 4
          %s625 = int_to_ptr.vmem [resolvable:$true] %s624
          %627 = dma.hbm_to_vmem [thread:$0]  %s13, 16, %s625, [#allocation26]
        $region60: #{tpu_custom_call.1} parent=11 // pred_fallthru
          _
        // Predicated region
        $region61: #{tpu_custom_call.1} parent=11 // pred_check
          %p628 = pneg %p380
        $region62: #{tpu_custom_call.1} parent=11 // pred_check_branch
          %630 = sbr.rel (%p628) target = $region64
        $region63: #{tpu_custom_call.1} parent=11 // pred_region
          %s632 = ssub.s32 512, 512
          %633 = vsyncadd [#allocation26], %s632
          %s634 = sshll.u32 [#allocation27], 4
          %s635 = int_to_ptr.vmem [resolvable:$true] %s634
          %640 = dma.hbm_to_vmem [thread:$0]  %s14, 512, %s635, [#allocation26], 64, 64, 4
        $region64: #{tpu_custom_call.1} parent=11 // pred_fallthru
          _
        // Predicated region
        $region65: #{tpu_custom_call.1} parent=11 // pred_check
          %p641 = pneg %p401
        $region66: #{tpu_custom_call.1} parent=11 // pred_check_branch
          %643 = sbr.rel (%p641) target = $region68
        $region67: #{tpu_custom_call.1} parent=11 // pred_region
          %s645 = ssub.s32 16, 16
          %646 = vsyncadd [#allocation29], %s645
          %s648 = sshll.u32 [#allocation28], 4
          %s649 = int_to_ptr.vmem [resolvable:$true] %s648
          %651 = dma.hbm_to_vmem [thread:$0]  %s15, 16, %s649, [#allocation29]
        $region68: #{tpu_custom_call.1} parent=11 // pred_fallthru
          _
        // Predicated region
        $region69: #{tpu_custom_call.1} parent=11 // pred_check
          %p652 = pneg %p422
        $region70: #{tpu_custom_call.1} parent=11 // pred_check_branch
          %654 = sbr.rel (%p652) target = $region72
        $region71: #{tpu_custom_call.1} parent=11 // pred_region
          %s656 = ssub.s32 16, 16
          %657 = vsyncadd [#allocation29], %s656
          %s659 = sshll.u32 [#allocation30], 4
          %s660 = int_to_ptr.vmem [resolvable:$true] %s659
          %662 = dma.hbm_to_vmem [thread:$0]  %s16, 16, %s660, [#allocation29]
        $region72: #{tpu_custom_call.1} parent=11 // pred_fallthru
          _
        // Predicated region
        $region73: #{tpu_custom_call.1} parent=11 // pred_check
          %p663 = pneg %p443
        $region74: #{tpu_custom_call.1} parent=11 // pred_check_branch
          %665 = sbr.rel (%p663) target = $region76
        $region75: #{tpu_custom_call.1} parent=11 // pred_region
          %s667 = ssub.s32 16, 16
          %668 = vsyncadd [#allocation32], %s667
          %s670 = sshll.u32 [#allocation31], 4
          %s671 = int_to_ptr.vmem [resolvable:$true] %s670
          %673 = dma.hbm_to_vmem [thread:$0]  %s17, 16, %s671, [#allocation32]
        $region76: #{tpu_custom_call.1} parent=11 // pred_fallthru
          _
      $region12: #{tpu_custom_call.1} parent=5 // pred_fallthru
        _
      %p674 = scmp.lt.s32.totalorder %s41, 2
      // Predicated region
      $region77: #{tpu_custom_call.1} parent=5 // pred_check
        %p675 = pneg %p674
      $region78: #{tpu_custom_call.1} parent=5 // pred_check_branch
        %677 = sbr.rel (%p675) target = $region80
      $region79: #{tpu_custom_call.1} parent=5 // pred_region
        // Predicated region
        $region81: #{tpu_custom_call.1} parent=79 // pred_check
          %p678 = pneg %p75
        $region82: #{tpu_custom_call.1} parent=79 // pred_check_branch
          %680 = sbr.rel (%p678) target = $region84
        $region83: #{tpu_custom_call.1} parent=79 // pred_region
          %s681 = sand.u32 %s65, 1
          %s682 = scalar_lea.sflag [#allocation5], %s681
          %s683 = sand.u32 %s65, 1
          %s684 = smul.addr %s683, 8
          %s685 = scalar_lea.vmem [#allocation4], %s684
          %s687 = ssub.s32 128, 128
          %688 = vsyncadd %s682, %s687
          %s689 = sadd.s32 %s49, %s48
          %s690 = smul.addr %s689, 128
          %s691 = scalar_lea.hbm %s0, %s690
          %s693 = sshll.u32 %s685, 4
          %s694 = int_to_ptr.vmem [resolvable:$true] %s693
          %696 = dma.hbm_to_vmem [thread:$0]  %s691, 128, %s694, %s682
        $region84: #{tpu_custom_call.1} parent=79 // pred_fallthru
          _
        // Predicated region
        $region85: #{tpu_custom_call.1} parent=79 // pred_check
          %p697 = pneg %p101
        $region86: #{tpu_custom_call.1} parent=79 // pred_check_branch
          %699 = sbr.rel (%p697) target = $region88
        $region87: #{tpu_custom_call.1} parent=79 // pred_region
          %s700 = sand.u32 %s41, 1
          %s701 = scalar_lea.sflag [#allocation8], %s700
          %s702 = sand.u32 %s91, 1
          %s703 = smul.addr %s702, 8
          %s704 = scalar_lea.vmem [#allocation7], %s703
          %s706 = ssub.s32 128, 128
          %707 = vsyncadd %s701, %s706
          %s708 = smul.addr %s48, 128
          %s709 = scalar_lea.hbm %s1, %s708
          %s711 = sshll.u32 %s704, 4
          %s712 = int_to_ptr.vmem [resolvable:$true] %s711
          %714 = dma.hbm_to_vmem [thread:$0]  %s709, 128, %s712, %s701
        $region88: #{tpu_custom_call.1} parent=79 // pred_fallthru
          _
      $region80: #{tpu_custom_call.1} parent=5 // pred_fallthru
        _
      %p715 = scmp.le.s32.totalorder 1, %s41
      %p716 = scmp.lt.s32.totalorder %s41, 3
      %p717 = pnand %p715, %p716
      %p718 = pneg %p717
      // Predicated region
      $region89: #{tpu_custom_call.1} parent=5 // pred_check
        _
      $region90: #{tpu_custom_call.1} parent=5 // pred_check_branch
        %720 = sbr.rel (%p717) target = $region92
      $region91: #{tpu_custom_call.1} parent=5 // pred_region
        %s721 = ssub.s32 %s41, 1
        %s722 = sand.u32 %s68, 1
        %s723 = scalar_lea.sflag [#allocation5], %s722
        %s724 = sand.u32 %s68, 1
        %s725 = smul.addr %s724, 8
        %s726 = scalar_lea.vmem [#allocation4], %s725
        // Predicated region
        $region93: #{tpu_custom_call.1} parent=91 // pred_check
          %p727 = pneg %p81
        $region94: #{tpu_custom_call.1} parent=91 // pred_check_branch
          %729 = sbr.rel (%p727) target = $region96
        $region95: #{tpu_custom_call.1} parent=91 // pred_region
          %730 = dma.done %s723, 128
        $region96: #{tpu_custom_call.1} parent=91 // pred_fallthru
          _
        %s731 = sand.u32 %s46, 1
        %s732 = scalar_lea.sflag [#allocation8], %s731
        %s733 = sand.u32 %s94, 1
        %s734 = smul.addr %s733, 8
        %s735 = scalar_lea.vmem [#allocation7], %s734
        // Predicated region
        $region97: #{tpu_custom_call.1} parent=91 // pred_check
          %p736 = pneg %p107
        $region98: #{tpu_custom_call.1} parent=91 // pred_check_branch
          %738 = sbr.rel (%p736) target = $region100
        $region99: #{tpu_custom_call.1} parent=91 // pred_region
          %739 = dma.done %s732, 128
        $region100: #{tpu_custom_call.1} parent=91 // pred_fallthru
          _
        // Predicated region
        $region101: #{tpu_custom_call.1} parent=91 // pred_check
          %p740 = pneg %p128
        $region102: #{tpu_custom_call.1} parent=91 // pred_check_branch
          %742 = sbr.rel (%p740) target = $region104
        $region103: #{tpu_custom_call.1} parent=91 // pred_region
          %743 = dma.done [#allocation8], 256
        $region104: #{tpu_custom_call.1} parent=91 // pred_fallthru
          _
        // Predicated region
        $region105: #{tpu_custom_call.1} parent=91 // pred_check
          %p744 = pneg %p149
        $region106: #{tpu_custom_call.1} parent=91 // pred_check_branch
          %746 = sbr.rel (%p744) target = $region108
        $region107: #{tpu_custom_call.1} parent=91 // pred_region
          %747 = dma.done [#allocation11], 16
        $region108: #{tpu_custom_call.1} parent=91 // pred_fallthru
          _
        // Predicated region
        $region109: #{tpu_custom_call.1} parent=91 // pred_check
          %p748 = pneg %p170
        $region110: #{tpu_custom_call.1} parent=91 // pred_check_branch
          %750 = sbr.rel (%p748) target = $region112
        $region111: #{tpu_custom_call.1} parent=91 // pred_region
          %751 = dma.done [#allocation11], 256
        $region112: #{tpu_custom_call.1} parent=91 // pred_fallthru
          _
        // Predicated region
        $region113: #{tpu_custom_call.1} parent=91 // pred_check
          %p752 = pneg %p191
        $region114: #{tpu_custom_call.1} parent=91 // pred_check_branch
          %754 = sbr.rel (%p752) target = $region116
        $region115: #{tpu_custom_call.1} parent=91 // pred_region
          %755 = dma.done [#allocation14], 16
        $region116: #{tpu_custom_call.1} parent=91 // pred_fallthru
          _
        // Predicated region
        $region117: #{tpu_custom_call.1} parent=91 // pred_check
          %p756 = pneg %p212
        $region118: #{tpu_custom_call.1} parent=91 // pred_check_branch
          %758 = sbr.rel (%p756) target = $region120
        $region119: #{tpu_custom_call.1} parent=91 // pred_region
          %759 = dma.done [#allocation14], 256
        $region120: #{tpu_custom_call.1} parent=91 // pred_fallthru
          _
        // Predicated region
        $region121: #{tpu_custom_call.1} parent=91 // pred_check
          %p760 = pneg %p233
        $region122: #{tpu_custom_call.1} parent=91 // pred_check_branch
          %762 = sbr.rel (%p760) target = $region124
        $region123: #{tpu_custom_call.1} parent=91 // pred_region
          %763 = dma.done [#allocation17], 16
        $region124: #{tpu_custom_call.1} parent=91 // pred_fallthru
          _
        // Predicated region
        $region125: #{tpu_custom_call.1} parent=91 // pred_check
          %p764 = pneg %p254
        $region126: #{tpu_custom_call.1} parent=91 // pred_check_branch
          %766 = sbr.rel (%p764) target = $region128
        $region127: #{tpu_custom_call.1} parent=91 // pred_region
          %767 = dma.done [#allocation17], 256
        $region128: #{tpu_custom_call.1} parent=91 // pred_fallthru
          _
        // Predicated region
        $region129: #{tpu_custom_call.1} parent=91 // pred_check
          %p768 = pneg %p275
        $region130: #{tpu_custom_call.1} parent=91 // pred_check_branch
          %770 = sbr.rel (%p768) target = $region132
        $region131: #{tpu_custom_call.1} parent=91 // pred_region
          %771 = dma.done [#allocation20], 16
        $region132: #{tpu_custom_call.1} parent=91 // pred_fallthru
          _
        // Predicated region
        $region133: #{tpu_custom_call.1} parent=91 // pred_check
          %p772 = pneg %p296
        $region134: #{tpu_custom_call.1} parent=91 // pred_check_branch
          %774 = sbr.rel (%p772) target = $region136
        $region135: #{tpu_custom_call.1} parent=91 // pred_region
          %775 = dma.done [#allocation20], 16
        $region136: #{tpu_custom_call.1} parent=91 // pred_fallthru
          _
        // Predicated region
        $region137: #{tpu_custom_call.1} parent=91 // pred_check
          %p776 = pneg %p317
        $region138: #{tpu_custom_call.1} parent=91 // pred_check_branch
          %778 = sbr.rel (%p776) target = $region140
        $region139: #{tpu_custom_call.1} parent=91 // pred_region
          %779 = dma.done [#allocation23], 16
        $region140: #{tpu_custom_call.1} parent=91 // pred_fallthru
          _
        // Predicated region
        $region141: #{tpu_custom_call.1} parent=91 // pred_check
          %p780 = pneg %p338
        $region142: #{tpu_custom_call.1} parent=91 // pred_check_branch
          %782 = sbr.rel (%p780) target = $region144
        $region143: #{tpu_custom_call.1} parent=91 // pred_region
          %783 = dma.done [#allocation23], 256
        $region144: #{tpu_custom_call.1} parent=91 // pred_fallthru
          _
        // Predicated region
        $region145: #{tpu_custom_call.1} parent=91 // pred_check
          %p784 = pneg %p359
        $region146: #{tpu_custom_call.1} parent=91 // pred_check_branch
          %786 = sbr.rel (%p784) target = $region148
        $region147: #{tpu_custom_call.1} parent=91 // pred_region
          %787 = dma.done [#allocation26], 16
        $region148: #{tpu_custom_call.1} parent=91 // pred_fallthru
          _
        // Predicated region
        $region149: #{tpu_custom_call.1} parent=91 // pred_check
          %p788 = pneg %p380
        $region150: #{tpu_custom_call.1} parent=91 // pred_check_branch
          %790 = sbr.rel (%p788) target = $region152
        $region151: #{tpu_custom_call.1} parent=91 // pred_region
          %791 = dma.done [#allocation26], 512
        $region152: #{tpu_custom_call.1} parent=91 // pred_fallthru
          _
        // Predicated region
        $region153: #{tpu_custom_call.1} parent=91 // pred_check
          %p792 = pneg %p401
        $region154: #{tpu_custom_call.1} parent=91 // pred_check_branch
          %794 = sbr.rel (%p792) target = $region156
        $region155: #{tpu_custom_call.1} parent=91 // pred_region
          %795 = dma.done [#allocation29], 16
        $region156: #{tpu_custom_call.1} parent=91 // pred_fallthru
          _
        // Predicated region
        $region157: #{tpu_custom_call.1} parent=91 // pred_check
          %p796 = pneg %p422
        $region158: #{tpu_custom_call.1} parent=91 // pred_check_branch
          %798 = sbr.rel (%p796) target = $region160
        $region159: #{tpu_custom_call.1} parent=91 // pred_region
          %799 = dma.done [#allocation29], 16
        $region160: #{tpu_custom_call.1} parent=91 // pred_fallthru
          _
        // Predicated region
        $region161: #{tpu_custom_call.1} parent=91 // pred_check
          %p800 = pneg %p443
        $region162: #{tpu_custom_call.1} parent=91 // pred_check_branch
          %802 = sbr.rel (%p800) target = $region164
        $region163: #{tpu_custom_call.1} parent=91 // pred_region
          %803 = dma.done [#allocation32], 16
        $region164: #{tpu_custom_call.1} parent=91 // pred_fallthru
          _
        %s804 = sand.u32 %s68, 1
        %s805 = scalar_lea.sflag [#allocation5], %s804
        %s806 = sand.u32 %s68, 1
        %s807 = smul.addr %s806, 8
        %s808 = scalar_lea.vmem [#allocation4], %s807
        %p809 = pneg %p81
        %p810 = pneg %p78
        %s811 = sand.u32 %s46, 1
        %s812 = scalar_lea.sflag [#allocation8], %s811
        %s813 = sand.u32 %s94, 1
        %s814 = smul.addr %s813, 8
        %s815 = scalar_lea.vmem [#allocation7], %s814
        %p816 = pneg %p107
        %p817 = pneg %p104
        %p818 = pneg %p128
        %p819 = pneg %p125
        %p820 = pneg %p149
        %p821 = pneg %p146
        %p822 = pneg %p170
        %p823 = pneg %p167
        %p824 = pneg %p191
        %p825 = pneg %p188
        %p826 = pneg %p212
        %p827 = pneg %p209
        %p828 = pneg %p233
        %p829 = pneg %p230
        %p830 = pneg %p254
        %p831 = pneg %p251
        %p832 = pneg %p275
        %p833 = pneg %p272
        %p834 = pneg %p296
        %p835 = pneg %p293
        %p836 = pneg %p317
        %p837 = pneg %p314
        %p838 = pneg %p338
        %p839 = pneg %p335
        %p840 = pneg %p359
        %p841 = pneg %p356
        %p842 = pneg %p380
        %p843 = pneg %p377
        %p844 = pneg %p401
        %p845 = pneg %p398
        %p846 = pneg %p422
        %p847 = pneg %p419
        %p848 = pneg %p443
        %p849 = pneg %p440
        %p850 = pneg %p471
        %p851 = pneg %p468
        %s852 = sand.u32 %s458, 1
        %s853 = scalar_lea.sflag [#allocation6], %s852
        %s854 = sand.u32 %s458, 1
        %s855 = smul.addr %s854, 8
        %s856 = scalar_lea.vmem [#allocation33], %s855
        %p858 = scmp.eq.s32.totalorder %s51, 0
        // Predicated region
        $region165: #{tpu_custom_call.1} parent=91 // pred_check
          %p859 = pneg %p858
        $region166: #{tpu_custom_call.1} parent=91 // pred_check_branch
          %861 = sbr.rel (%p859) target = $region168
        $region167: #{tpu_custom_call.1} parent=91 // pred_region
          %v862 = vld [vmem:[%s735] sm:$0xff]
          %v863 = vpack.c.bf16 %v862, %v862
          %v864 = vld [vmem:[#allocation12] sm:$0xf]
          %v865 = vld [vmem:[#allocation12 + $0x4] sm:$0xf]
          %v866 = vld [vmem:[#allocation12 + $0x8] sm:$0xf]
          %v867 = vld [vmem:[#allocation12 + $0xc] sm:$0xf]
          %v868 = vld [vmem:[#allocation13] sm:$0x1]
          %v870 = vlaneseq
          %v871 = vshrl.u32 %v870, 7
          %v872 = vsub.s32 0, %v871
          %v873 = vrot.slane %v868, %v872
          %v879 = vunpack.c.l.b16 %v864
          %v880 = vunpack.c.l.b16 %v865
          %v881 = vunpack.c.l.b16 %v866
          %v882 = vunpack.c.l.b16 %v867
          %v883 = vpack.c.b16 %v880, %v879
          %v884 = vpack.c.b16 %v882, %v881
          %vm887 = vcmask 261120
          %v889 = vsel %vm887, %v863, 0
          %891 = vmatprep.subr.bf16.mxu0 0
          %892 = vmatpush1.bf16.msra.mxu0 %v883
          %893 = vmatprep.subr.bf16.mxu0 0
          %894 = vmatpush1.bf16.msra.mxu0 %v884
          %895 = vmatprep.subr.bf16.mxu0 0
          %896 = vmatpush1.bf16.msra.mxu0 0
          %897 = vmatprep.subr.bf16.mxu0 0
          %898 = vmatpush1.bf16.msra.mxu0 0
          %899 = vmatprep.subr.bf16.mxu0 0
          %900 = vmatpush1.bf16.msra.mxu0 0
          %901 = vmatprep.subr.bf16.mxu0 0
          %902 = vmatpush1.bf16.msra.mxu0 0
          %903 = vmatprep.subr.bf16.mxu0 0
          %904 = vmatpush1.bf16.msra.mxu0 0
          %905 = vmatprep.subr.bf16.mxu0 0
          %906 = vmatpush1.bf16.msra.mxu0 0
          %907 = vmatprep.subr.bf16.mxu0 0
          %908 = vmatpush1.bf16.msra.mxu0 0
          %909 = vmatprep.subr.bf16.mxu0 0
          %910 = vmatpush1.bf16.msra.mxu0 0
          %911 = vmatprep.subr.bf16.mxu0 0
          %912 = vmatpush1.bf16.msra.mxu0 0
          %913 = vmatprep.subr.bf16.mxu0 0
          %914 = vmatpush1.bf16.msra.mxu0 0
          %915 = vmatprep.subr.bf16.mxu0 0
          %916 = vmatpush1.bf16.msra.mxu0 0
          %917 = vmatprep.subr.bf16.mxu0 0
          %918 = vmatpush1.bf16.msra.mxu0 0
          %919 = vmatprep.subr.bf16.mxu0 0
          %920 = vmatpush1.bf16.msra.mxu0 0
          %921 = vmatprep.subr.bf16.mxu0 0
          %922 = vmatpush1.bf16.msra.mxu0 0
          %923 = vmatprep.mubr.bf16.mxu0 0
          %924 = vmatmul.mubr.bf16.gmra.mrb[0].mxu0 %v889
          %v925 = vpop.f32.mrb[0].mxu0
          %v926 = vadd.f32 %v873, %v925
          %v927 = vpop.f32.mrb[0].mxu0
          %v928 = vpop.f32.mrb[0].mxu0
          %v929 = vpop.f32.mrb[0].mxu0
          %930 = vdwg.mxu0
          %v931 = vld [vmem:[#allocation15] sm:$0xf]
          %v932 = vld [vmem:[#allocation15 + $0x4] sm:$0xf]
          %v933 = vld [vmem:[#allocation15 + $0x8] sm:$0xf]
          %v934 = vld [vmem:[#allocation15 + $0xc] sm:$0xf]
          %v935 = vld [vmem:[#allocation16] sm:$0x1]
          %v937 = vlaneseq
          %v938 = vshrl.u32 %v937, 7
          %v939 = vsub.s32 0, %v938
          %v940 = vrot.slane %v935, %v939
          %v946 = vunpack.c.l.b16 %v931
          %v947 = vunpack.c.l.b16 %v932
          %v948 = vunpack.c.l.b16 %v933
          %v949 = vunpack.c.l.b16 %v934
          %v950 = vpack.c.b16 %v947, %v946
          %v951 = vpack.c.b16 %v949, %v948
          %954 = vmatprep.subr.bf16.mxu0 0
          %955 = vmatpush1.bf16.msra.mxu0 %v950
          %956 = vmatprep.subr.bf16.mxu0 0
          %957 = vmatpush1.bf16.msra.mxu0 %v951
          %958 = vmatprep.subr.bf16.mxu0 0
          %959 = vmatpush1.bf16.msra.mxu0 0
          %960 = vmatprep.subr.bf16.mxu0 0
          %961 = vmatpush1.bf16.msra.mxu0 0
          %962 = vmatprep.subr.bf16.mxu0 0
          %963 = vmatpush1.bf16.msra.mxu0 0
          %964 = vmatprep.subr.bf16.mxu0 0
          %965 = vmatpush1.bf16.msra.mxu0 0
          %966 = vmatprep.subr.bf16.mxu0 0
          %967 = vmatpush1.bf16.msra.mxu0 0
          %968 = vmatprep.subr.bf16.mxu0 0
          %969 = vmatpush1.bf16.msra.mxu0 0
          %970 = vmatprep.subr.bf16.mxu0 0
          %971 = vmatpush1.bf16.msra.mxu0 0
          %972 = vmatprep.subr.bf16.mxu0 0
          %973 = vmatpush1.bf16.msra.mxu0 0
          %974 = vmatprep.subr.bf16.mxu0 0
          %975 = vmatpush1.bf16.msra.mxu0 0
          %976 = vmatprep.subr.bf16.mxu0 0
          %977 = vmatpush1.bf16.msra.mxu0 0
          %978 = vmatprep.subr.bf16.mxu0 0
          %979 = vmatpush1.bf16.msra.mxu0 0
          %980 = vmatprep.subr.bf16.mxu0 0
          %981 = vmatpush1.bf16.msra.mxu0 0
          %982 = vmatprep.subr.bf16.mxu0 0
          %983 = vmatpush1.bf16.msra.mxu0 0
          %984 = vmatprep.subr.bf16.mxu0 0
          %985 = vmatpush1.bf16.msra.mxu0 0
          %986 = vmatprep.mubr.bf16.mxu0 0
          %987 = vmatmul.mubr.bf16.gmra.mrb[0].mxu0 %v889
          %v988 = vpop.f32.mrb[0].mxu0
          %v989 = vadd.f32 %v940, %v988
          %v990 = vpop.f32.mrb[0].mxu0
          %v991 = vpop.f32.mrb[0].mxu0
          %v992 = vpop.f32.mrb[0].mxu0
          %993 = vdwg.mxu0
          %v994 = vpack.c.bf16 %v926, %v926
          %vm995 = vcmask 60416
          %996 = vst.msk [vmem:[#allocation2] sm:$0xf] %vm995, %v994
          %v997 = vpack.c.bf16 %v989, %v989
          %998 = vst.msk [vmem:[#allocation3] sm:$0xf] %vm995, %v997
          %v1000 = vunpack.c.l.b16 %v994
          %v1001 = vpack.c.b16 %v1000, %v1000
          %1002 = vrot.lane.b32.xlu0 %v1001, 120
          %v1003 = vpop.permute.xlu0 %1002
          %s1005 = scalar_lea.vmem [#allocation2], 4
          %1006 = vst.msk [vmem:[%s1005] sm:$0xf] %vm995, %v1003
          %v1008 = vunpack.c.l.b16 %v997
          %v1009 = vpack.c.b16 %v1008, %v1008
          %1010 = vrot.lane.b32.xlu0 %v1009, 120
          %v1011 = vpop.permute.xlu0 %1010
          %s1013 = scalar_lea.vmem [#allocation3], 4
          %1014 = vst.msk [vmem:[%s1013] sm:$0xf] %vm995, %v1011
          %1015 = vrot.lane.b32.xlu0 %v1001, 112
          %v1016 = vpop.permute.xlu0 %1015
          %s1018 = scalar_lea.vmem [#allocation2], 8
          %1019 = vst.msk [vmem:[%s1018] sm:$0xf] %vm995, %v1016
          %1020 = vrot.lane.b32.xlu0 %v1009, 112
          %v1021 = vpop.permute.xlu0 %1020
          %s1023 = scalar_lea.vmem [#allocation3], 8
          %1024 = vst.msk [vmem:[%s1023] sm:$0xf] %vm995, %v1021
          %1025 = vrot.lane.b32.xlu0 %v1001, 104
          %v1026 = vpop.permute.xlu0 %1025
          %s1028 = scalar_lea.vmem [#allocation2], 12
          %1029 = vst.msk [vmem:[%s1028] sm:$0xf] %vm995, %v1026
          %1030 = vrot.lane.b32.xlu0 %v1009, 104
          %v1031 = vpop.permute.xlu0 %1030
          %s1033 = scalar_lea.vmem [#allocation3], 12
          %1034 = vst.msk [vmem:[%s1033] sm:$0xf] %vm995, %v1031
        $region168: #{tpu_custom_call.1} parent=91 // pred_fallthru
          _
        %v1035 = vld [vmem:[%s726] sm:$0xff]
        %v1036 = vpack.c.bf16 %v1035, %v1035
        %v1037 = vld [vmem:[#allocation9] sm:$0xf]
        %v1038 = vld [vmem:[#allocation9 + $0x4] sm:$0xf]
        %v1039 = vld [vmem:[#allocation9 + $0x8] sm:$0xf]
        %v1040 = vld [vmem:[#allocation9 + $0xc] sm:$0xf]
        %v1041 = vld [vmem:[#allocation10] sm:$0x1]
        %v1043 = vlaneseq
        %v1044 = vshrl.u32 %v1043, 7
        %v1045 = vsub.s32 0, %v1044
        %v1046 = vrot.slane %v1041, %v1045
        %v1052 = vunpack.c.l.b16 %v1037
        %v1053 = vunpack.c.l.b16 %v1038
        %v1054 = vunpack.c.l.b16 %v1039
        %v1055 = vunpack.c.l.b16 %v1040
        %v1056 = vpack.c.b16 %v1053, %v1052
        %v1057 = vpack.c.b16 %v1055, %v1054
        %vm1060 = vcmask 261120
        %v1062 = vsel %vm1060, %v1036, 0
        %1064 = vmatprep.subr.bf16.mxu0 0
        %1065 = vmatpush1.bf16.msra.mxu0 %v1056
        %1066 = vmatprep.subr.bf16.mxu0 0
        %1067 = vmatpush1.bf16.msra.mxu0 %v1057
        %1068 = vmatprep.subr.bf16.mxu0 0
        %1069 = vmatpush1.bf16.msra.mxu0 0
        %1070 = vmatprep.subr.bf16.mxu0 0
        %1071 = vmatpush1.bf16.msra.mxu0 0
        %1072 = vmatprep.subr.bf16.mxu0 0
        %1073 = vmatpush1.bf16.msra.mxu0 0
        %1074 = vmatprep.subr.bf16.mxu0 0
        %1075 = vmatpush1.bf16.msra.mxu0 0
        %1076 = vmatprep.subr.bf16.mxu0 0
        %1077 = vmatpush1.bf16.msra.mxu0 0
        %1078 = vmatprep.subr.bf16.mxu0 0
        %1079 = vmatpush1.bf16.msra.mxu0 0
        %1080 = vmatprep.subr.bf16.mxu0 0
        %1081 = vmatpush1.bf16.msra.mxu0 0
        %1082 = vmatprep.subr.bf16.mxu0 0
        %1083 = vmatpush1.bf16.msra.mxu0 0
        %1084 = vmatprep.subr.bf16.mxu0 0
        %1085 = vmatpush1.bf16.msra.mxu0 0
        %1086 = vmatprep.subr.bf16.mxu0 0
        %1087 = vmatpush1.bf16.msra.mxu0 0
        %1088 = vmatprep.subr.bf16.mxu0 0
        %1089 = vmatpush1.bf16.msra.mxu0 0
        %1090 = vmatprep.subr.bf16.mxu0 0
        %1091 = vmatpush1.bf16.msra.mxu0 0
        %1092 = vmatprep.subr.bf16.mxu0 0
        %1093 = vmatpush1.bf16.msra.mxu0 0
        %1094 = vmatprep.subr.bf16.mxu0 0
        %1095 = vmatpush1.bf16.msra.mxu0 0
        %1096 = vmatprep.mubr.bf16.mxu0 0
        %1097 = vmatmul.mubr.bf16.gmra.mrb[0].mxu0 %v1062
        %v1098 = vpop.f32.mrb[0].mxu0
        %v1099 = vadd.f32 %v1046, %v1098
        %v1100 = vpop.f32.mrb[0].mxu0
        %v1101 = vpop.f32.mrb[0].mxu0
        %v1102 = vpop.f32.mrb[0].mxu0
        %1103 = vdwg.mxu0
        %v1104 = vmul.f32 %v1099, 0.35355338
        %1106 = vrot.lane.b32.xlu0 %v1104, 120
        %v1107 = vpop.permute.xlu0 %1106
        %1109 = vrot.lane.b32.xlu0 %v1104, 112
        %v1110 = vpop.permute.xlu0 %1109
        %1112 = vrot.lane.b32.xlu0 %v1104, 104
        %v1113 = vpop.permute.xlu0 %1112
        %v1115 = vpack.c.bf16 %v1104, %v1104
        %v1116 = vpack.c.bf16 %v1107, %v1107
        %v1117 = vpack.c.bf16 %v1110, %v1110
        %v1118 = vpack.c.bf16 %v1113, %v1113
        %v1119 = vld [vmem:[#allocation2] sm:$0xf]
        %v1120 = vld [vmem:[#allocation2 + $0x4] sm:$0xf]
        %v1121 = vld [vmem:[#allocation2 + $0x8] sm:$0xf]
        %v1122 = vld [vmem:[#allocation2 + $0xc] sm:$0xf]
        %vm1123 = vcmask 64512
        %v1125 = vsel %vm1123, %v1115, 0
        %v1128 = vsel %vm1123, %v1119, 0
        %1130 = vmatprep.subr.bf16.mxu0 0
        %1131 = vmatpush1.bf16.xpose.msra.mxu0 %v1128
        %1132 = vmatprep.subr.bf16.mxu0 0
        %1133 = vmatpush1.bf16.xpose.msra.mxu0 0
        %1134 = vmatprep.subr.bf16.mxu0 0
        %1135 = vmatpush1.bf16.xpose.msra.mxu0 0
        %1136 = vmatprep.subr.bf16.mxu0 0
        %1137 = vmatpush1.bf16.xpose.msra.mxu0 0
        %1138 = vmatprep.subr.bf16.mxu0 0
        %1139 = vmatpush1.bf16.xpose.msra.mxu0 0
        %1140 = vmatprep.subr.bf16.mxu0 0
        %1141 = vmatpush1.bf16.xpose.msra.mxu0 0
        %1142 = vmatprep.subr.bf16.mxu0 0
        %1143 = vmatpush1.bf16.xpose.msra.mxu0 0
        %1144 = vmatprep.subr.bf16.mxu0 0
        %1145 = vmatpush1.bf16.xpose.msra.mxu0 0
        %1146 = vmatprep.subr.bf16.mxu0 0
        %1147 = vmatpush1.bf16.xpose.msra.mxu0 0
        %1148 = vmatprep.subr.bf16.mxu0 0
        %1149 = vmatpush1.bf16.xpose.msra.mxu0 0
        %1150 = vmatprep.subr.bf16.mxu0 0
        %1151 = vmatpush1.bf16.xpose.msra.mxu0 0
        %1152 = vmatprep.subr.bf16.mxu0 0
        %1153 = vmatpush1.bf16.xpose.msra.mxu0 0
        %1154 = vmatprep.subr.bf16.mxu0 0
        %1155 = vmatpush1.bf16.xpose.msra.mxu0 0
        %1156 = vmatprep.subr.bf16.mxu0 0
        %1157 = vmatpush1.bf16.xpose.msra.mxu0 0
        %1158 = vmatprep.subr.bf16.mxu0 0
        %1159 = vmatpush1.bf16.xpose.msra.mxu0 0
        %1160 = vmatprep.subr.bf16.mxu0 0
        %1161 = vmatpush1.bf16.xpose.msra.mxu0 0
        %1162 = vmatprep.mubr.bf16.mxu0 0
        %1163 = vmatmul.mubr.bf16.gmra.mrb[0].mxu0 %v1125
        %v1164 = vpop.f32.mrb[0].mxu0
        %v1165 = vadd.f32 0.0, %v1164
        %v1166 = vpop.f32.mrb[0].mxu0
        %v1167 = vpop.f32.mrb[0].mxu0
        %v1168 = vpop.f32.mrb[0].mxu0
        %1169 = vdwg.mxu0
        %v1171 = vsel %vm1123, %v1116, 0
        %v1174 = vsel %vm1123, %v1120, 0
        %1176 = vmatprep.subr.bf16.mxu0 0
        %1177 = vmatpush1.bf16.xpose.msra.mxu0 %v1174
        %1178 = vmatprep.subr.bf16.mxu0 0
        %1179 = vmatpush1.bf16.xpose.msra.mxu0 0
        %1180 = vmatprep.subr.bf16.mxu0 0
        %1181 = vmatpush1.bf16.xpose.msra.mxu0 0
        %1182 = vmatprep.subr.bf16.mxu0 0
        %1183 = vmatpush1.bf16.xpose.msra.mxu0 0
        %1184 = vmatprep.subr.bf16.mxu0 0
        %1185 = vmatpush1.bf16.xpose.msra.mxu0 0
        %1186 = vmatprep.subr.bf16.mxu0 0
        %1187 = vmatpush1.bf16.xpose.msra.mxu0 0
        %1188 = vmatprep.subr.bf16.mxu0 0
        %1189 = vmatpush1.bf16.xpose.msra.mxu0 0
        %1190 = vmatprep.subr.bf16.mxu0 0
        %1191 = vmatpush1.bf16.xpose.msra.mxu0 0
        %1192 = vmatprep.subr.bf16.mxu0 0
        %1193 = vmatpush1.bf16.xpose.msra.mxu0 0
        %1194 = vmatprep.subr.bf16.mxu0 0
        %1195 = vmatpush1.bf16.xpose.msra.mxu0 0
        %1196 = vmatprep.subr.bf16.mxu0 0
        %1197 = vmatpush1.bf16.xpose.msra.mxu0 0
        %1198 = vmatprep.subr.bf16.mxu0 0
        %1199 = vmatpush1.bf16.xpose.msra.mxu0 0
        %1200 = vmatprep.subr.bf16.mxu0 0
        %1201 = vmatpush1.bf16.xpose.msra.mxu0 0
        %1202 = vmatprep.subr.bf16.mxu0 0
        %1203 = vmatpush1.bf16.xpose.msra.mxu0 0
        %1204 = vmatprep.subr.bf16.mxu0 0
        %1205 = vmatpush1.bf16.xpose.msra.mxu0 0
        %1206 = vmatprep.subr.bf16.mxu0 0
        %1207 = vmatpush1.bf16.xpose.msra.mxu0 0
        %1208 = vmatprep.mubr.bf16.mxu0 0
        %1209 = vmatmul.mubr.bf16.gmra.mrb[0].mxu0 %v1171
        %v1210 = vpop.f32.mrb[0].mxu0
        %v1211 = vadd.f32 0.0, %v1210
        %v1212 = vpop.f32.mrb[0].mxu0
        %v1213 = vpop.f32.mrb[0].mxu0
        %v1214 = vpop.f32.mrb[0].mxu0
        %1215 = vdwg.mxu0
        %v1217 = vsel %vm1123, %v1117, 0
        %v1220 = vsel %vm1123, %v1121, 0
        %1222 = vmatprep.subr.bf16.mxu0 0
        %1223 = vmatpush1.bf16.xpose.msra.mxu0 %v1220
        %1224 = vmatprep.subr.bf16.mxu0 0
        %1225 = vmatpush1.bf16.xpose.msra.mxu0 0
        %1226 = vmatprep.subr.bf16.mxu0 0
        %1227 = vmatpush1.bf16.xpose.msra.mxu0 0
        %1228 = vmatprep.subr.bf16.mxu0 0
        %1229 = vmatpush1.bf16.xpose.msra.mxu0 0
        %1230 = vmatprep.subr.bf16.mxu0 0
        %1231 = vmatpush1.bf16.xpose.msra.mxu0 0
        %1232 = vmatprep.subr.bf16.mxu0 0
        %1233 = vmatpush1.bf16.xpose.msra.mxu0 0
        %1234 = vmatprep.subr.bf16.mxu0 0
        %1235 = vmatpush1.bf16.xpose.msra.mxu0 0
        %1236 = vmatprep.subr.bf16.mxu0 0
        %1237 = vmatpush1.bf16.xpose.msra.mxu0 0
        %1238 = vmatprep.subr.bf16.mxu0 0
        %1239 = vmatpush1.bf16.xpose.msra.mxu0 0
        %1240 = vmatprep.subr.bf16.mxu0 0
        %1241 = vmatpush1.bf16.xpose.msra.mxu0 0
        %1242 = vmatprep.subr.bf16.mxu0 0
        %1243 = vmatpush1.bf16.xpose.msra.mxu0 0
        %1244 = vmatprep.subr.bf16.mxu0 0
        %1245 = vmatpush1.bf16.xpose.msra.mxu0 0
        %1246 = vmatprep.subr.bf16.mxu0 0
        %1247 = vmatpush1.bf16.xpose.msra.mxu0 0
        %1248 = vmatprep.subr.bf16.mxu0 0
        %1249 = vmatpush1.bf16.xpose.msra.mxu0 0
        %1250 = vmatprep.subr.bf16.mxu0 0
        %1251 = vmatpush1.bf16.xpose.msra.mxu0 0
        %1252 = vmatprep.subr.bf16.mxu0 0
        %1253 = vmatpush1.bf16.xpose.msra.mxu0 0
        %1254 = vmatprep.mubr.bf16.mxu0 0
        %1255 = vmatmul.mubr.bf16.gmra.mrb[0].mxu0 %v1217
        %v1256 = vpop.f32.mrb[0].mxu0
        %v1257 = vadd.f32 0.0, %v1256
        %v1258 = vpop.f32.mrb[0].mxu0
        %v1259 = vpop.f32.mrb[0].mxu0
        %v1260 = vpop.f32.mrb[0].mxu0
        %1261 = vdwg.mxu0
        %v1263 = vsel %vm1123, %v1118, 0
        %v1266 = vsel %vm1123, %v1122, 0
        %1268 = vmatprep.subr.bf16.mxu0 0
        %1269 = vmatpush1.bf16.xpose.msra.mxu0 %v1266
        %1270 = vmatprep.subr.bf16.mxu0 0
        %1271 = vmatpush1.bf16.xpose.msra.mxu0 0
        %1272 = vmatprep.subr.bf16.mxu0 0
        %1273 = vmatpush1.bf16.xpose.msra.mxu0 0
        %1274 = vmatprep.subr.bf16.mxu0 0
        %1275 = vmatpush1.bf16.xpose.msra.mxu0 0
        %1276 = vmatprep.subr.bf16.mxu0 0
        %1277 = vmatpush1.bf16.xpose.msra.mxu0 0
        %1278 = vmatprep.subr.bf16.mxu0 0
        %1279 = vmatpush1.bf16.xpose.msra.mxu0 0
        %1280 = vmatprep.subr.bf16.mxu0 0
        %1281 = vmatpush1.bf16.xpose.msra.mxu0 0
        %1282 = vmatprep.subr.bf16.mxu0 0
        %1283 = vmatpush1.bf16.xpose.msra.mxu0 0
        %1284 = vmatprep.subr.bf16.mxu0 0
        %1285 = vmatpush1.bf16.xpose.msra.mxu0 0
        %1286 = vmatprep.subr.bf16.mxu0 0
        %1287 = vmatpush1.bf16.xpose.msra.mxu0 0
        %1288 = vmatprep.subr.bf16.mxu0 0
        %1289 = vmatpush1.bf16.xpose.msra.mxu0 0
        %1290 = vmatprep.subr.bf16.mxu0 0
        %1291 = vmatpush1.bf16.xpose.msra.mxu0 0
        %1292 = vmatprep.subr.bf16.mxu0 0
        %1293 = vmatpush1.bf16.xpose.msra.mxu0 0
        %1294 = vmatprep.subr.bf16.mxu0 0
        %1295 = vmatpush1.bf16.xpose.msra.mxu0 0
        %1296 = vmatprep.subr.bf16.mxu0 0
        %1297 = vmatpush1.bf16.xpose.msra.mxu0 0
        %1298 = vmatprep.subr.bf16.mxu0 0
        %1299 = vmatpush1.bf16.xpose.msra.mxu0 0
        %1300 = vmatprep.mubr.bf16.mxu0 0
        %1301 = vmatmul.mubr.bf16.gmra.mrb[0].mxu0 %v1263
        %v1302 = vpop.f32.mrb[0].mxu0
        %v1303 = vadd.f32 0.0, %v1302
        %v1304 = vpop.f32.mrb[0].mxu0
        %v1305 = vpop.f32.mrb[0].mxu0
        %v1306 = vpop.f32.mrb[0].mxu0
        %1307 = vdwg.mxu0
        %v1308 = vsel %vm1123, %v1165, -inf
        %1309 = vmax.xlane.f32.xlu0 %v1308
        %v1310 = vpop.xlane.xlu0 %1309
        %v1311 = vsel %vm1123, %v1211, -inf
        %1312 = vmax.xlane.f32.xlu0 %v1311
        %v1313 = vpop.xlane.xlu0 %1312
        %v1314 = vsel %vm1123, %v1257, -inf
        %1315 = vmax.xlane.f32.xlu0 %v1314
        %v1316 = vpop.xlane.xlu0 %1315
        %v1317 = vsel %vm1123, %v1303, -inf
        %1318 = vmax.xlane.f32.xlu0 %v1317
        %v1319 = vpop.xlane.xlu0 %1318
        %v1320 = vsub.f32 %v1165, %v1310
        %v1321 = vsub.f32 %v1211, %v1313
        %v1322 = vsub.f32 %v1257, %v1316
        %v1323 = vsub.f32 %v1303, %v1319
        %v1324 = vmul.f32 %v1320, 1.442695
        %v1325 = vpow.pop %v1324
        %v1326 = vmul.f32 %v1321, 1.442695
        %v1327 = vpow.pop %v1326
        %v1328 = vmul.f32 %v1322, 1.442695
        %v1329 = vpow.pop %v1328
        %v1330 = vmul.f32 %v1323, 1.442695
        %v1331 = vpow.pop %v1330
        %v1332 = vsel %vm1123, %v1325, 0.0
        %1333 = vadd.xlane.f32.xlu0 %v1332
        %v1334 = vpop.xlane.xlu0 %1333
        %v1335 = vsel %vm1123, %v1327, 0.0
        %1336 = vadd.xlane.f32.xlu0 %v1335
        %v1337 = vpop.xlane.xlu0 %1336
        %v1338 = vsel %vm1123, %v1329, 0.0
        %1339 = vadd.xlane.f32.xlu0 %v1338
        %v1340 = vpop.xlane.xlu0 %1339
        %v1341 = vsel %vm1123, %v1331, 0.0
        %1342 = vadd.xlane.f32.xlu0 %v1341
        %v1343 = vpop.xlane.xlu0 %1342
        %v1344 = vrcp.pop %v1334
        %v1345 = vrcp.pop %v1337
        %v1346 = vrcp.pop %v1340
        %v1347 = vrcp.pop %v1343
        %v1348 = vmul.f32 %v1325, %v1344
        %v1349 = vmul.f32 %v1327, %v1345
        %v1350 = vmul.f32 %v1329, %v1346
        %v1351 = vmul.f32 %v1331, %v1347
        %v1352 = vpack.c.bf16 %v1348, %v1348
        %v1353 = vpack.c.bf16 %v1349, %v1349
        %v1354 = vpack.c.bf16 %v1350, %v1350
        %v1355 = vpack.c.bf16 %v1351, %v1351
        %v1356 = vld [vmem:[#allocation3] sm:$0xf]
        %v1357 = vld [vmem:[#allocation3 + $0x4] sm:$0xf]
        %v1358 = vld [vmem:[#allocation3 + $0x8] sm:$0xf]
        %v1359 = vld [vmem:[#allocation3 + $0xc] sm:$0xf]
        %v1361 = vsel %vm1123, %v1352, 0
        %vm1363 = vcmask 1043456
        %v1365 = vsel %vm1363, %v1356, 0
        %1367 = vmatprep.subr.bf16.mxu0 0
        %1368 = vmatpush1.bf16.msra.mxu0 %v1365
        %1369 = vmatprep.subr.bf16.mxu0 0
        %1370 = vmatpush1.bf16.msra.mxu0 0
        %1371 = vmatprep.subr.bf16.mxu0 0
        %1372 = vmatpush1.bf16.msra.mxu0 0
        %1373 = vmatprep.subr.bf16.mxu0 0
        %1374 = vmatpush1.bf16.msra.mxu0 0
        %1375 = vmatprep.subr.bf16.mxu0 0
        %1376 = vmatpush1.bf16.msra.mxu0 0
        %1377 = vmatprep.subr.bf16.mxu0 0
        %1378 = vmatpush1.bf16.msra.mxu0 0
        %1379 = vmatprep.subr.bf16.mxu0 0
        %1380 = vmatpush1.bf16.msra.mxu0 0
        %1381 = vmatprep.subr.bf16.mxu0 0
        %1382 = vmatpush1.bf16.msra.mxu0 0
        %1383 = vmatprep.subr.bf16.mxu0 0
        %1384 = vmatpush1.bf16.msra.mxu0 0
        %1385 = vmatprep.subr.bf16.mxu0 0
        %1386 = vmatpush1.bf16.msra.mxu0 0
        %1387 = vmatprep.subr.bf16.mxu0 0
        %1388 = vmatpush1.bf16.msra.mxu0 0
        %1389 = vmatprep.subr.bf16.mxu0 0
        %1390 = vmatpush1.bf16.msra.mxu0 0
        %1391 = vmatprep.subr.bf16.mxu0 0
        %1392 = vmatpush1.bf16.msra.mxu0 0
        %1393 = vmatprep.subr.bf16.mxu0 0
        %1394 = vmatpush1.bf16.msra.mxu0 0
        %1395 = vmatprep.subr.bf16.mxu0 0
        %1396 = vmatpush1.bf16.msra.mxu0 0
        %1397 = vmatprep.subr.bf16.mxu0 0
        %1398 = vmatpush1.bf16.msra.mxu0 0
        %1399 = vmatprep.mubr.bf16.mxu0 0
        %1400 = vmatmul.mubr.bf16.gmra.mrb[0].mxu0 %v1361
        %v1401 = vpop.f32.mrb[0].mxu0
        %v1402 = vadd.f32 0.0, %v1401
        %v1403 = vpop.f32.mrb[0].mxu0
        %v1404 = vpop.f32.mrb[0].mxu0
        %v1405 = vpop.f32.mrb[0].mxu0
        %1406 = vdwg.mxu0
        %v1408 = vsel %vm1123, %v1353, 0
        %v1411 = vsel %vm1363, %v1357, 0
        %1413 = vmatprep.subr.bf16.mxu0 0
        %1414 = vmatpush1.bf16.msra.mxu0 %v1411
        %1415 = vmatprep.subr.bf16.mxu0 0
        %1416 = vmatpush1.bf16.msra.mxu0 0
        %1417 = vmatprep.subr.bf16.mxu0 0
        %1418 = vmatpush1.bf16.msra.mxu0 0
        %1419 = vmatprep.subr.bf16.mxu0 0
        %1420 = vmatpush1.bf16.msra.mxu0 0
        %1421 = vmatprep.subr.bf16.mxu0 0
        %1422 = vmatpush1.bf16.msra.mxu0 0
        %1423 = vmatprep.subr.bf16.mxu0 0
        %1424 = vmatpush1.bf16.msra.mxu0 0
        %1425 = vmatprep.subr.bf16.mxu0 0
        %1426 = vmatpush1.bf16.msra.mxu0 0
        %1427 = vmatprep.subr.bf16.mxu0 0
        %1428 = vmatpush1.bf16.msra.mxu0 0
        %1429 = vmatprep.subr.bf16.mxu0 0
        %1430 = vmatpush1.bf16.msra.mxu0 0
        %1431 = vmatprep.subr.bf16.mxu0 0
        %1432 = vmatpush1.bf16.msra.mxu0 0
        %1433 = vmatprep.subr.bf16.mxu0 0
        %1434 = vmatpush1.bf16.msra.mxu0 0
        %1435 = vmatprep.subr.bf16.mxu0 0
        %1436 = vmatpush1.bf16.msra.mxu0 0
        %1437 = vmatprep.subr.bf16.mxu0 0
        %1438 = vmatpush1.bf16.msra.mxu0 0
        %1439 = vmatprep.subr.bf16.mxu0 0
        %1440 = vmatpush1.bf16.msra.mxu0 0
        %1441 = vmatprep.subr.bf16.mxu0 0
        %1442 = vmatpush1.bf16.msra.mxu0 0
        %1443 = vmatprep.subr.bf16.mxu0 0
        %1444 = vmatpush1.bf16.msra.mxu0 0
        %1445 = vmatprep.mubr.bf16.mxu0 0
        %1446 = vmatmul.mubr.bf16.gmra.mrb[0].mxu0 %v1408
        %v1447 = vpop.f32.mrb[0].mxu0
        %v1448 = vadd.f32 0.0, %v1447
        %v1449 = vpop.f32.mrb[0].mxu0
        %v1450 = vpop.f32.mrb[0].mxu0
        %v1451 = vpop.f32.mrb[0].mxu0
        %1452 = vdwg.mxu0
        %v1454 = vsel %vm1123, %v1354, 0
        %v1457 = vsel %vm1363, %v1358, 0
        %1459 = vmatprep.subr.bf16.mxu0 0
        %1460 = vmatpush1.bf16.msra.mxu0 %v1457
        %1461 = vmatprep.subr.bf16.mxu0 0
        %1462 = vmatpush1.bf16.msra.mxu0 0
        %1463 = vmatprep.subr.bf16.mxu0 0
        %1464 = vmatpush1.bf16.msra.mxu0 0
        %1465 = vmatprep.subr.bf16.mxu0 0
        %1466 = vmatpush1.bf16.msra.mxu0 0
        %1467 = vmatprep.subr.bf16.mxu0 0
        %1468 = vmatpush1.bf16.msra.mxu0 0
        %1469 = vmatprep.subr.bf16.mxu0 0
        %1470 = vmatpush1.bf16.msra.mxu0 0
        %1471 = vmatprep.subr.bf16.mxu0 0
        %1472 = vmatpush1.bf16.msra.mxu0 0
        %1473 = vmatprep.subr.bf16.mxu0 0
        %1474 = vmatpush1.bf16.msra.mxu0 0
        %1475 = vmatprep.subr.bf16.mxu0 0
        %1476 = vmatpush1.bf16.msra.mxu0 0
        %1477 = vmatprep.subr.bf16.mxu0 0
        %1478 = vmatpush1.bf16.msra.mxu0 0
        %1479 = vmatprep.subr.bf16.mxu0 0
        %1480 = vmatpush1.bf16.msra.mxu0 0
        %1481 = vmatprep.subr.bf16.mxu0 0
        %1482 = vmatpush1.bf16.msra.mxu0 0
        %1483 = vmatprep.subr.bf16.mxu0 0
        %1484 = vmatpush1.bf16.msra.mxu0 0
        %1485 = vmatprep.subr.bf16.mxu0 0
        %1486 = vmatpush1.bf16.msra.mxu0 0
        %1487 = vmatprep.subr.bf16.mxu0 0
        %1488 = vmatpush1.bf16.msra.mxu0 0
        %1489 = vmatprep.subr.bf16.mxu0 0
        %1490 = vmatpush1.bf16.msra.mxu0 0
        %1491 = vmatprep.mubr.bf16.mxu0 0
        %1492 = vmatmul.mubr.bf16.gmra.mrb[0].mxu0 %v1454
        %v1493 = vpop.f32.mrb[0].mxu0
        %v1494 = vadd.f32 0.0, %v1493
        %v1495 = vpop.f32.mrb[0].mxu0
        %v1496 = vpop.f32.mrb[0].mxu0
        %v1497 = vpop.f32.mrb[0].mxu0
        %1498 = vdwg.mxu0
        %v1500 = vsel %vm1123, %v1355, 0
        %v1503 = vsel %vm1363, %v1359, 0
        %1505 = vmatprep.subr.bf16.mxu0 0
        %1506 = vmatpush1.bf16.msra.mxu0 %v1503
        %1507 = vmatprep.subr.bf16.mxu0 0
        %1508 = vmatpush1.bf16.msra.mxu0 0
        %1509 = vmatprep.subr.bf16.mxu0 0
        %1510 = vmatpush1.bf16.msra.mxu0 0
        %1511 = vmatprep.subr.bf16.mxu0 0
        %1512 = vmatpush1.bf16.msra.mxu0 0
        %1513 = vmatprep.subr.bf16.mxu0 0
        %1514 = vmatpush1.bf16.msra.mxu0 0
        %1515 = vmatprep.subr.bf16.mxu0 0
        %1516 = vmatpush1.bf16.msra.mxu0 0
        %1517 = vmatprep.subr.bf16.mxu0 0
        %1518 = vmatpush1.bf16.msra.mxu0 0
        %1519 = vmatprep.subr.bf16.mxu0 0
        %1520 = vmatpush1.bf16.msra.mxu0 0
        %1521 = vmatprep.subr.bf16.mxu0 0
        %1522 = vmatpush1.bf16.msra.mxu0 0
        %1523 = vmatprep.subr.bf16.mxu0 0
        %1524 = vmatpush1.bf16.msra.mxu0 0
        %1525 = vmatprep.subr.bf16.mxu0 0
        %1526 = vmatpush1.bf16.msra.mxu0 0
        %1527 = vmatprep.subr.bf16.mxu0 0
        %1528 = vmatpush1.bf16.msra.mxu0 0
        %1529 = vmatprep.subr.bf16.mxu0 0
        %1530 = vmatpush1.bf16.msra.mxu0 0
        %1531 = vmatprep.subr.bf16.mxu0 0
        %1532 = vmatpush1.bf16.msra.mxu0 0
        %1533 = vmatprep.subr.bf16.mxu0 0
        %1534 = vmatpush1.bf16.msra.mxu0 0
        %1535 = vmatprep.subr.bf16.mxu0 0
        %1536 = vmatpush1.bf16.msra.mxu0 0
        %1537 = vmatprep.mubr.bf16.mxu0 0
        %1538 = vmatmul.mubr.bf16.gmra.mrb[0].mxu0 %v1500
        %v1539 = vpop.f32.mrb[0].mxu0
        %v1540 = vadd.f32 0.0, %v1539
        %v1541 = vpop.f32.mrb[0].mxu0
        %v1542 = vpop.f32.mrb[0].mxu0
        %v1543 = vpop.f32.mrb[0].mxu0
        %1544 = vdwg.mxu0
        %v1545 = vpack.c.bf16 %v1402, %v1402
        %v1546 = vld [vmem:[#allocation18] sm:$0xf]
        %v1547 = vpack.c.bf16 %v1448, %v1448
        %s1548 = scalar_lea.vmem [#allocation18], 4
        %v1549 = vld [vmem:[%s1548] sm:$0xf]
        %v1551 = vsel %vm1123, %v1547, 0
        %v1554 = vsel %vm1363, %v1549, 0
        %1556 = vmatprep.subr.bf16.mxu0 0
        %1557 = vmatpush1.bf16.msra.mxu0 %v1554
        %1558 = vmatprep.subr.bf16.mxu0 0
        %1559 = vmatpush1.bf16.msra.mxu0 0
        %1560 = vmatprep.subr.bf16.mxu0 0
        %1561 = vmatpush1.bf16.msra.mxu0 0
        %1562 = vmatprep.subr.bf16.mxu0 0
        %1563 = vmatpush1.bf16.msra.mxu0 0
        %1564 = vmatprep.subr.bf16.mxu0 0
        %1565 = vmatpush1.bf16.msra.mxu0 0
        %1566 = vmatprep.subr.bf16.mxu0 0
        %1567 = vmatpush1.bf16.msra.mxu0 0
        %1568 = vmatprep.subr.bf16.mxu0 0
        %1569 = vmatpush1.bf16.msra.mxu0 0
        %1570 = vmatprep.subr.bf16.mxu0 0
        %1571 = vmatpush1.bf16.msra.mxu0 0
        %1572 = vmatprep.subr.bf16.mxu0 0
        %1573 = vmatpush1.bf16.msra.mxu0 0
        %1574 = vmatprep.subr.bf16.mxu0 0
        %1575 = vmatpush1.bf16.msra.mxu0 0
        %1576 = vmatprep.subr.bf16.mxu0 0
        %1577 = vmatpush1.bf16.msra.mxu0 0
        %1578 = vmatprep.subr.bf16.mxu0 0
        %1579 = vmatpush1.bf16.msra.mxu0 0
        %1580 = vmatprep.subr.bf16.mxu0 0
        %1581 = vmatpush1.bf16.msra.mxu0 0
        %1582 = vmatprep.subr.bf16.mxu0 0
        %1583 = vmatpush1.bf16.msra.mxu0 0
        %1584 = vmatprep.subr.bf16.mxu0 0
        %1585 = vmatpush1.bf16.msra.mxu0 0
        %1586 = vmatprep.subr.bf16.mxu0 0
        %1587 = vmatpush1.bf16.msra.mxu0 0
        %1588 = vmatprep.mubr.bf16.mxu0 0
        %1589 = vmatmul.mubr.bf16.gmra.mrb[0].mxu0 %v1551
        %v1590 = vpop.f32.mrb[0].mxu0
        %v1591 = vadd.f32 0.0, %v1590
        %v1592 = vpop.f32.mrb[0].mxu0
        %v1593 = vpop.f32.mrb[0].mxu0
        %v1594 = vpop.f32.mrb[0].mxu0
        %1595 = vdwg.mxu0
        %v1597 = vsel %vm1123, %v1545, 0
        %v1600 = vsel %vm1363, %v1546, 0
        %1602 = vmatprep.subr.bf16.mxu0 0
        %1603 = vmatpush1.bf16.msra.mxu0 %v1600
        %1604 = vmatprep.subr.bf16.mxu0 0
        %1605 = vmatpush1.bf16.msra.mxu0 0
        %1606 = vmatprep.subr.bf16.mxu0 0
        %1607 = vmatpush1.bf16.msra.mxu0 0
        %1608 = vmatprep.subr.bf16.mxu0 0
        %1609 = vmatpush1.bf16.msra.mxu0 0
        %1610 = vmatprep.subr.bf16.mxu0 0
        %1611 = vmatpush1.bf16.msra.mxu0 0
        %1612 = vmatprep.subr.bf16.mxu0 0
        %1613 = vmatpush1.bf16.msra.mxu0 0
        %1614 = vmatprep.subr.bf16.mxu0 0
        %1615 = vmatpush1.bf16.msra.mxu0 0
        %1616 = vmatprep.subr.bf16.mxu0 0
        %1617 = vmatpush1.bf16.msra.mxu0 0
        %1618 = vmatprep.subr.bf16.mxu0 0
        %1619 = vmatpush1.bf16.msra.mxu0 0
        %1620 = vmatprep.subr.bf16.mxu0 0
        %1621 = vmatpush1.bf16.msra.mxu0 0
        %1622 = vmatprep.subr.bf16.mxu0 0
        %1623 = vmatpush1.bf16.msra.mxu0 0
        %1624 = vmatprep.subr.bf16.mxu0 0
        %1625 = vmatpush1.bf16.msra.mxu0 0
        %1626 = vmatprep.subr.bf16.mxu0 0
        %1627 = vmatpush1.bf16.msra.mxu0 0
        %1628 = vmatprep.subr.bf16.mxu0 0
        %1629 = vmatpush1.bf16.msra.mxu0 0
        %1630 = vmatprep.subr.bf16.mxu0 0
        %1631 = vmatpush1.bf16.msra.mxu0 0
        %1632 = vmatprep.subr.bf16.mxu0 0
        %1633 = vmatpush1.bf16.msra.mxu0 0
        %1634 = vmatprep.mubr.bf16.mxu0 0
        %1635 = vmatmul.mubr.bf16.gmra.mrb[0].mxu0 %v1597
        %v1636 = vpop.f32.mrb[0].mxu0
        %v1637 = vadd.f32 %v1591, %v1636
        %v1638 = vpop.f32.mrb[0].mxu0
        %v1639 = vpop.f32.mrb[0].mxu0
        %v1640 = vpop.f32.mrb[0].mxu0
        %1641 = vdwg.mxu0
        %v1642 = vpack.c.bf16 %v1494, %v1494
        %s1643 = scalar_lea.vmem [#allocation18], 8
        %v1644 = vld [vmem:[%s1643] sm:$0xf]
        %v1646 = vsel %vm1123, %v1642, 0
        %v1649 = vsel %vm1363, %v1644, 0
        %1651 = vmatprep.subr.bf16.mxu0 0
        %1652 = vmatpush1.bf16.msra.mxu0 %v1649
        %1653 = vmatprep.subr.bf16.mxu0 0
        %1654 = vmatpush1.bf16.msra.mxu0 0
        %1655 = vmatprep.subr.bf16.mxu0 0
        %1656 = vmatpush1.bf16.msra.mxu0 0
        %1657 = vmatprep.subr.bf16.mxu0 0
        %1658 = vmatpush1.bf16.msra.mxu0 0
        %1659 = vmatprep.subr.bf16.mxu0 0
        %1660 = vmatpush1.bf16.msra.mxu0 0
        %1661 = vmatprep.subr.bf16.mxu0 0
        %1662 = vmatpush1.bf16.msra.mxu0 0
        %1663 = vmatprep.subr.bf16.mxu0 0
        %1664 = vmatpush1.bf16.msra.mxu0 0
        %1665 = vmatprep.subr.bf16.mxu0 0
        %1666 = vmatpush1.bf16.msra.mxu0 0
        %1667 = vmatprep.subr.bf16.mxu0 0
        %1668 = vmatpush1.bf16.msra.mxu0 0
        %1669 = vmatprep.subr.bf16.mxu0 0
        %1670 = vmatpush1.bf16.msra.mxu0 0
        %1671 = vmatprep.subr.bf16.mxu0 0
        %1672 = vmatpush1.bf16.msra.mxu0 0
        %1673 = vmatprep.subr.bf16.mxu0 0
        %1674 = vmatpush1.bf16.msra.mxu0 0
        %1675 = vmatprep.subr.bf16.mxu0 0
        %1676 = vmatpush1.bf16.msra.mxu0 0
        %1677 = vmatprep.subr.bf16.mxu0 0
        %1678 = vmatpush1.bf16.msra.mxu0 0
        %1679 = vmatprep.subr.bf16.mxu0 0
        %1680 = vmatpush1.bf16.msra.mxu0 0
        %1681 = vmatprep.subr.bf16.mxu0 0
        %1682 = vmatpush1.bf16.msra.mxu0 0
        %1683 = vmatprep.mubr.bf16.mxu0 0
        %1684 = vmatmul.mubr.bf16.gmra.mrb[0].mxu0 %v1646
        %v1685 = vpop.f32.mrb[0].mxu0
        %v1686 = vadd.f32 0.0, %v1685
        %v1687 = vpop.f32.mrb[0].mxu0
        %v1688 = vpop.f32.mrb[0].mxu0
        %v1689 = vpop.f32.mrb[0].mxu0
        %1690 = vdwg.mxu0
        %v1691 = vadd.f32 %v1637, %v1686
        %v1692 = vpack.c.bf16 %v1540, %v1540
        %s1693 = scalar_lea.vmem [#allocation18], 12
        %v1694 = vld [vmem:[%s1693] sm:$0xf]
        %v1696 = vsel %vm1123, %v1692, 0
        %v1699 = vsel %vm1363, %v1694, 0
        %1701 = vmatprep.subr.bf16.mxu0 0
        %1702 = vmatpush1.bf16.msra.mxu0 %v1699
        %1703 = vmatprep.subr.bf16.mxu0 0
        %1704 = vmatpush1.bf16.msra.mxu0 0
        %1705 = vmatprep.subr.bf16.mxu0 0
        %1706 = vmatpush1.bf16.msra.mxu0 0
        %1707 = vmatprep.subr.bf16.mxu0 0
        %1708 = vmatpush1.bf16.msra.mxu0 0
        %1709 = vmatprep.subr.bf16.mxu0 0
        %1710 = vmatpush1.bf16.msra.mxu0 0
        %1711 = vmatprep.subr.bf16.mxu0 0
        %1712 = vmatpush1.bf16.msra.mxu0 0
        %1713 = vmatprep.subr.bf16.mxu0 0
        %1714 = vmatpush1.bf16.msra.mxu0 0
        %1715 = vmatprep.subr.bf16.mxu0 0
        %1716 = vmatpush1.bf16.msra.mxu0 0
        %1717 = vmatprep.subr.bf16.mxu0 0
        %1718 = vmatpush1.bf16.msra.mxu0 0
        %1719 = vmatprep.subr.bf16.mxu0 0
        %1720 = vmatpush1.bf16.msra.mxu0 0
        %1721 = vmatprep.subr.bf16.mxu0 0
        %1722 = vmatpush1.bf16.msra.mxu0 0
        %1723 = vmatprep.subr.bf16.mxu0 0
        %1724 = vmatpush1.bf16.msra.mxu0 0
        %1725 = vmatprep.subr.bf16.mxu0 0
        %1726 = vmatpush1.bf16.msra.mxu0 0
        %1727 = vmatprep.subr.bf16.mxu0 0
        %1728 = vmatpush1.bf16.msra.mxu0 0
        %1729 = vmatprep.subr.bf16.mxu0 0
        %1730 = vmatpush1.bf16.msra.mxu0 0
        %1731 = vmatprep.subr.bf16.mxu0 0
        %1732 = vmatpush1.bf16.msra.mxu0 0
        %1733 = vmatprep.mubr.bf16.mxu0 0
        %1734 = vmatmul.mubr.bf16.gmra.mrb[0].mxu0 %v1696
        %v1735 = vpop.f32.mrb[0].mxu0
        %v1736 = vadd.f32 0.0, %v1735
        %v1737 = vpop.f32.mrb[0].mxu0
        %v1738 = vpop.f32.mrb[0].mxu0
        %v1739 = vpop.f32.mrb[0].mxu0
        %1740 = vdwg.mxu0
        %v1741 = vadd.f32 %v1691, %v1736
        %v1742 = vld [vmem:[#allocation19] sm:$0x1]
        %v1744 = vlaneseq
        %v1745 = vshrl.u32 %v1744, 7
        %v1746 = vsub.s32 0, %v1745
        %v1747 = vrot.slane %v1742, %v1746
        %v1749 = vadd.f32 %v1741, %v1747
        %v1750 = vadd.f32 %v1035, %v1749
        %v1751 = vld [vmem:[#allocation21] sm:$0x1]
        %v1752 = vld [vmem:[#allocation22] sm:$0x1]
        %v1753 = vsel %vm1060, %v1750, 0.0
        %1754 = vadd.xlane.f32.xlu0 %v1753
        %v1755 = vpop.xlane.xlu0 %1754
        %v1756 = vrcp.pop 32.0
        %v1757 = vmul.f32 %v1755, %v1756
        %v1758 = vsub.f32 %v1750, %v1757
        %v1759 = vmul.f32 %v1758, %v1758
        %v1760 = vsel %vm1060, %v1759, 0.0
        %1761 = vadd.xlane.f32.xlu0 %v1760
        %v1762 = vpop.xlane.xlu0 %1761
        %v1763 = vmul.f32 %v1762, %v1756
        %v1764 = vadd.f32 %v1763, 1e-05
        %v1765 = vrsqrt.pop %v1764
        %v1766 = vmul.f32 %v1758, %v1765
        %v1768 = vlaneseq
        %v1769 = vshrl.u32 %v1768, 7
        %v1770 = vsub.s32 0, %v1769
        %v1771 = vrot.slane %v1751, %v1770
        %v1773 = vmul.f32 %v1766, %v1771
        %v1775 = vlaneseq
        %v1776 = vshrl.u32 %v1775, 7
        %v1777 = vsub.s32 0, %v1776
        %v1778 = vrot.slane %v1752, %v1777
        %v1780 = vadd.f32 %v1773, %v1778
        %v1781 = vpack.c.bf16 %v1780, %v1780
        %v1782 = vld [vmem:[#allocation24] sm:$0xf]
        %v1783 = vld [vmem:[#allocation24 + $0x4] sm:$0xf]
        %v1784 = vld [vmem:[#allocation24 + $0x8] sm:$0xf]
        %v1785 = vld [vmem:[#allocation24 + $0xc] sm:$0xf]
        %v1786 = vld [vmem:[#allocation25] sm:$0x1]
        %v1788 = vlaneseq
        %v1789 = vshrl.u32 %v1788, 7
        %v1790 = vsub.s32 0, %v1789
        %v1791 = vrot.slane %v1786, %v1790
        %v1797 = vunpack.c.l.b16 %v1782
        %v1798 = vunpack.c.l.b16 %v1783
        %v1799 = vunpack.c.l.b16 %v1784
        %v1800 = vunpack.c.l.b16 %v1785
        %v1801 = vpack.c.b16 %v1798, %v1797
        %v1802 = vpack.c.b16 %v1800, %v1799
        %v1806 = vsel %vm1060, %v1781, 0
        %1808 = vmatprep.subr.bf16.mxu0 0
        %1809 = vmatpush1.bf16.msra.mxu0 %v1801
        %1810 = vmatprep.subr.bf16.mxu0 0
        %1811 = vmatpush1.bf16.msra.mxu0 %v1802
        %1812 = vmatprep.subr.bf16.mxu0 0
        %1813 = vmatpush1.bf16.msra.mxu0 0
        %1814 = vmatprep.subr.bf16.mxu0 0
        %1815 = vmatpush1.bf16.msra.mxu0 0
        %1816 = vmatprep.subr.bf16.mxu0 0
        %1817 = vmatpush1.bf16.msra.mxu0 0
        %1818 = vmatprep.subr.bf16.mxu0 0
        %1819 = vmatpush1.bf16.msra.mxu0 0
        %1820 = vmatprep.subr.bf16.mxu0 0
        %1821 = vmatpush1.bf16.msra.mxu0 0
        %1822 = vmatprep.subr.bf16.mxu0 0
        %1823 = vmatpush1.bf16.msra.mxu0 0
        %1824 = vmatprep.subr.bf16.mxu0 0
        %1825 = vmatpush1.bf16.msra.mxu0 0
        %1826 = vmatprep.subr.bf16.mxu0 0
        %1827 = vmatpush1.bf16.msra.mxu0 0
        %1828 = vmatprep.subr.bf16.mxu0 0
        %1829 = vmatpush1.bf16.msra.mxu0 0
        %1830 = vmatprep.subr.bf16.mxu0 0
        %1831 = vmatpush1.bf16.msra.mxu0 0
        %1832 = vmatprep.subr.bf16.mxu0 0
        %1833 = vmatpush1.bf16.msra.mxu0 0
        %1834 = vmatprep.subr.bf16.mxu0 0
        %1835 = vmatpush1.bf16.msra.mxu0 0
        %1836 = vmatprep.subr.bf16.mxu0 0
        %1837 = vmatpush1.bf16.msra.mxu0 0
        %1838 = vmatprep.subr.bf16.mxu0 0
        %1839 = vmatpush1.bf16.msra.mxu0 0
        %1840 = vmatprep.mubr.bf16.mxu0 0
        %1841 = vmatmul.mubr.bf16.gmra.mrb[0].mxu0 %v1806
        %v1842 = vpop.f32.mrb[0].mxu0
        %v1843 = vadd.f32 %v1791, %v1842
        %v1844 = vpop.f32.mrb[0].mxu0
        %v1845 = vpop.f32.mrb[0].mxu0
        %v1846 = vpop.f32.mrb[0].mxu0
        %1847 = vdwg.mxu0
        %v1848 = vmax.f32 %v1843, 0.0
        %v1849 = vpack.c.bf16 %v1848, %v1848
        %v1850 = vld [vmem:[#allocation27] sm:$0xf]
        %v1851 = vld [vmem:[#allocation27 + $0x4] sm:$0xf]
        %v1852 = vld [vmem:[#allocation27 + $0x8] sm:$0xf]
        %v1853 = vld [vmem:[#allocation27 + $0xc] sm:$0xf]
        %v1854 = vld [vmem:[#allocation27 + $0x10] sm:$0xf]
        %v1855 = vld [vmem:[#allocation27 + $0x14] sm:$0xf]
        %v1856 = vld [vmem:[#allocation27 + $0x18] sm:$0xf]
        %v1857 = vld [vmem:[#allocation27 + $0x1c] sm:$0xf]
        %v1858 = vld [vmem:[#allocation28] sm:$0x1]
        %v1860 = vlaneseq
        %v1861 = vshrl.u32 %v1860, 7
        %v1862 = vsub.s32 0, %v1861
        %v1863 = vrot.slane %v1858, %v1862
        %v1873 = vunpack.c.l.b16 %v1850
        %v1874 = vunpack.c.l.b16 %v1851
        %v1875 = vunpack.c.l.b16 %v1852
        %v1876 = vunpack.c.l.b16 %v1853
        %v1877 = vunpack.c.l.b16 %v1854
        %v1878 = vunpack.c.l.b16 %v1855
        %v1879 = vunpack.c.l.b16 %v1856
        %v1880 = vunpack.c.l.b16 %v1857
        %v1881 = vpack.c.b16 %v1874, %v1873
        %v1882 = vpack.c.b16 %v1876, %v1875
        %v1883 = vpack.c.b16 %v1878, %v1877
        %v1884 = vpack.c.b16 %v1880, %v1879
        %vm1889 = vcmask 523264
        %v1891 = vsel %vm1889, %v1849, 0
        %1893 = vmatprep.subr.bf16.mxu0 0
        %1894 = vmatpush1.bf16.msra.mxu0 %v1881
        %1895 = vmatprep.subr.bf16.mxu0 0
        %1896 = vmatpush1.bf16.msra.mxu0 %v1882
        %1897 = vmatprep.subr.bf16.mxu0 0
        %1898 = vmatpush1.bf16.msra.mxu0 %v1883
        %1899 = vmatprep.subr.bf16.mxu0 0
        %1900 = vmatpush1.bf16.msra.mxu0 %v1884
        %1901 = vmatprep.subr.bf16.mxu0 0
        %1902 = vmatpush1.bf16.msra.mxu0 0
        %1903 = vmatprep.subr.bf16.mxu0 0
        %1904 = vmatpush1.bf16.msra.mxu0 0
        %1905 = vmatprep.subr.bf16.mxu0 0
        %1906 = vmatpush1.bf16.msra.mxu0 0
        %1907 = vmatprep.subr.bf16.mxu0 0
        %1908 = vmatpush1.bf16.msra.mxu0 0
        %1909 = vmatprep.subr.bf16.mxu0 0
        %1910 = vmatpush1.bf16.msra.mxu0 0
        %1911 = vmatprep.subr.bf16.mxu0 0
        %1912 = vmatpush1.bf16.msra.mxu0 0
        %1913 = vmatprep.subr.bf16.mxu0 0
        %1914 = vmatpush1.bf16.msra.mxu0 0
        %1915 = vmatprep.subr.bf16.mxu0 0
        %1916 = vmatpush1.bf16.msra.mxu0 0
        %1917 = vmatprep.subr.bf16.mxu0 0
        %1918 = vmatpush1.bf16.msra.mxu0 0
        %1919 = vmatprep.subr.bf16.mxu0 0
        %1920 = vmatpush1.bf16.msra.mxu0 0
        %1921 = vmatprep.subr.bf16.mxu0 0
        %1922 = vmatpush1.bf16.msra.mxu0 0
        %1923 = vmatprep.subr.bf16.mxu0 0
        %1924 = vmatpush1.bf16.msra.mxu0 0
        %1925 = vmatprep.mubr.bf16.mxu0 0
        %1926 = vmatmul.mubr.bf16.gmra.mrb[0].mxu0 %v1891
        %v1927 = vpop.f32.mrb[0].mxu0
        %v1928 = vadd.f32 %v1863, %v1927
        %v1929 = vpop.f32.mrb[0].mxu0
        %v1930 = vpop.f32.mrb[0].mxu0
        %v1931 = vpop.f32.mrb[0].mxu0
        %1932 = vdwg.mxu0
        %v1933 = vadd.f32 %v1780, %v1928
        %v1934 = vld [vmem:[#allocation30] sm:$0x1]
        %v1935 = vld [vmem:[#allocation31] sm:$0x1]
        %v1936 = vsel %vm1060, %v1933, 0.0
        %1937 = vadd.xlane.f32.xlu0 %v1936
        %v1938 = vpop.xlane.xlu0 %1937
        %v1939 = vmul.f32 %v1938, %v1756
        %v1940 = vsub.f32 %v1933, %v1939
        %v1941 = vmul.f32 %v1940, %v1940
        %v1942 = vsel %vm1060, %v1941, 0.0
        %1943 = vadd.xlane.f32.xlu0 %v1942
        %v1944 = vpop.xlane.xlu0 %1943
        %v1945 = vmul.f32 %v1944, %v1756
        %v1946 = vadd.f32 %v1945, 1e-05
        %v1947 = vrsqrt.pop %v1946
        %v1948 = vmul.f32 %v1940, %v1947
        %v1950 = vlaneseq
        %v1951 = vshrl.u32 %v1950, 7
        %v1952 = vsub.s32 0, %v1951
        %v1953 = vrot.slane %v1934, %v1952
        %v1955 = vmul.f32 %v1948, %v1953
        %v1957 = vlaneseq
        %v1958 = vshrl.u32 %v1957, 7
        %v1959 = vsub.s32 0, %v1958
        %v1960 = vrot.slane %v1935, %v1959
        %v1962 = vadd.f32 %v1955, %v1960
        %1963 = vst.msk [vmem:[%s856] sm:$0xff] %vm1060, %v1962
        %s1964 = sand.u32 %s458, 1
        %s1965 = scalar_lea.sflag [#allocation6], %s1964
        %s1966 = sand.u32 %s458, 1
        %s1967 = smul.addr %s1966, 8
        %s1968 = scalar_lea.vmem [#allocation33], %s1967
        // Predicated region
        $region169: #{tpu_custom_call.1} parent=91 // pred_check
          %p1969 = pneg %p468
        $region170: #{tpu_custom_call.1} parent=91 // pred_check_branch
          %1971 = sbr.rel (%p1969) target = $region172
        $region171: #{tpu_custom_call.1} parent=91 // pred_region
          %s1973 = ssub.s32 128, 128
          %1974 = vsyncadd %s1965, %s1973
          %s1975 = sadd.s32 %s51, %s50
          %s1976 = smul.addr %s1975, 128
          %s1977 = scalar_lea.hbm %s18, %s1976
          %s1979 = sshll.u32 %s1968, 4
          %s1980 = int_to_ptr.vmem [resolvable:$true] %s1979
          %1982 = dma.vmem_to_hbm [thread:$0]  %s1980, 128, %s1977, %s1965
        $region172: #{tpu_custom_call.1} parent=91 // pred_fallthru
          _
      $region92: #{tpu_custom_call.1} parent=5 // pred_fallthru
        _
      %p1983 = scmp.le.s32.totalorder 2, %s41
      // Predicated region
      $region173: #{tpu_custom_call.1} parent=5 // pred_check
        %p1984 = pneg %p1983
      $region174: #{tpu_custom_call.1} parent=5 // pred_check_branch
        %1986 = sbr.rel (%p1984) target = $region176
      $region175: #{tpu_custom_call.1} parent=5 // pred_region
        %s1987 = ssub.s32 %s41, 2
        // Predicated region
        $region177: #{tpu_custom_call.1} parent=175 // pred_check
          %p1988 = pneg %p474
        $region178: #{tpu_custom_call.1} parent=175 // pred_check_branch
          %1990 = sbr.rel (%p1988) target = $region180
        $region179: #{tpu_custom_call.1} parent=175 // pred_region
          %s1991 = sand.u32 %s459, 1
          %s1992 = scalar_lea.sflag [#allocation6], %s1991
          %s1993 = sand.u32 %s459, 1
          %s1994 = smul.addr %s1993, 8
          %s1995 = scalar_lea.vmem [#allocation33], %s1994
          %1996 = dma.done %s1992, 128
        $region180: #{tpu_custom_call.1} parent=175 // pred_fallthru
          _
      $region176: #{tpu_custom_call.1} parent=5 // pred_fallthru
        _
    $region6: #{tpu_custom_call.1} parent=1 // loop_footer
      %s45 = sadd.s32 1, %s41
    $region7: #{tpu_custom_call.1} parent=1 // loop_footer_branch
      %40 = sbr.rel target = $region3
    $region8: #{tpu_custom_call.1} parent=1 // loop_exit
      _
    %1997 = vsyncpa [#allocation5], 1
    %s1998 = scalar_lea.sflag [#allocation5], 1
    %1999 = vsyncpa %s1998, 1
    %2000 = vsyncpa [#allocation8], 1
    %s2001 = scalar_lea.sflag [#allocation8], 1
    %2002 = vsyncpa %s2001, 1
    %2003 = vsyncpa [#allocation11], 1
    %2004 = vsyncpa [#allocation14], 1
    %2005 = vsyncpa [#allocation17], 1
    %2006 = vsyncpa [#allocation20], 1
    %2007 = vsyncpa [#allocation23], 1
    %2008 = vsyncpa [#allocation26], 1
    %2009 = vsyncpa [#allocation29], 1
    %2010 = vsyncpa [#allocation32], 1
    %2011 = vsyncpa [#allocation6], 1
    %s2012 = scalar_lea.sflag [#allocation6], 1
    %2013 = vsyncpa %s2012, 1

</llo_original>
